<compile_context>
chip_gen: v7x
topology: tpu7x:2x2x1
jax: 0.10.0
libtpu: 0.0.40
codegen_flags: <defaults>
</compile_context>

<pallas_src>
import functools

import jax
import jax.numpy as jnp
from jax.experimental import pallas as pl
from jax.experimental.pallas import tpu as pltpu


def _global_attention_kernel(x_ref, wexp_ref, rs_ref, ep_ref, eot_ref,
                             maske_ref, q_ref, maskh_ref, ws_ref, b_ref,
                             o_ref, *, num_heads):
    # x_ref:     (L, C)      L = Bb*N tokens for this grid step, natural order (b_local, n)
    # wexp_ref:  (3J, C)     J = H*H*D; [scale*eq@Wq ; ek@Wk ; ek@Wv]
    # rs_ref:    (H*H, J)    sum over d, g-major output rows (row = H*g + h)
    # ep_ref:    (J, H*H)    broadcast softmax back to (h, g, d) rows
    # eot_ref:   (H*C, J)    sum over g, output rows (e, h, d) (tiled over e)
    # maske_ref: (H*C, L)    [row's e == input lane's e]
    # q_ref:     (L, L)      0/1 lane-collapse: [same batch][input a == output a]
    # maskh_ref: (H*C, L)    [row's h == output lane's h]
    # ws_ref:    (C, H*C)    proj weight tiled over h
    # b_ref:     (C, 1)      proj bias (broadcast over lanes)
    # o_ref:     (C, L)      lane-dense output block, column = b_local*N + (h*A + a)
    H = num_heads
    f32 = jnp.float32
    L, C = x_ref.shape
    J = wexp_ref.shape[0] // 3

    # ---- tokens to the lane axis (single small 2-D transpose, hides under MXU work) ----
    xt = x_ref[...].T                                                    # (C, L)

    # ---- expanded qkv projection: one MXU matmul, scale already folded in ----
    qkvb = jnp.dot(wexp_ref[...], xt, preferred_element_type=f32)        # (3J, L)
    qb = qkvb[0 * J:1 * J, :]          # qb[(h,g,d), l] = scale * q[n, h, d]
    kb = qkvb[1 * J:2 * J, :]          # kb[(h,g,d), l] = k[n, g, d]
    vb = qkvb[2 * J:3 * J, :]          # vb[(h,g,d), l] = v[n, g, d]

    # ---- per-token attention logits across heads: s[H*g + h, l] = scale * q[n,h,:]·k[n,g,:] ----
    s = jnp.dot(rs_ref[...], qb * kb, preferred_element_type=f32)        # (H*H, L)

    # ---- softmax over g: g-major rows -> reductions are elementwise across 8 slabs (VPU) ----
    s3 = s.reshape(H, H, L)                                              # [g, h, l]
    mx = jnp.max(s3, axis=0)                                             # (H, L)
    ex = jnp.exp(s3 - mx[None])                                          # (H, H, L)
    inv = pl.reciprocal(jnp.sum(ex, axis=0), approx=True)                # (H, L)  EUP slot
    p = (ex * inv[None]).reshape(H * H, L)                               # row = H*g + h

    # ---- attn @ v, expanded rows: o2[(e,h,d), l] = sum_g p[n,h,g] * v[n,g,d] ----
    pb = jnp.dot(ep_ref[...], p, preferred_element_type=f32)             # (J, L)
    o2 = jnp.dot(eot_ref[...], pb * vb, preferred_element_type=f32)      # (H*C, L)

    # ---- PyTorch scramble + proj as one-hot permutation matmuls (all MXU/VPU, no relayouts) ----
    # r1[(e,h,d), out-lane (b,h_out,a)] = attn_out[token a*H + e, h, d]
    r1 = jnp.dot(o2 * maske_ref[...], q_ref[...], preferred_element_type=f32)   # (H*C, L)
    # mask h == h_out, then contract (e,h,d) with the h-tiled proj weight.
    out = jnp.dot(ws_ref[...], r1 * maskh_ref[...],
                  preferred_element_type=f32) + b_ref[...]               # (C, L)
    o_ref[...] = out.astype(o_ref.dtype)


def _batches_per_block(B, N, target_lanes=128):
    bb = max(1, min(B, target_lanes // max(N, 1)))
    while B % bb:
        bb -= 1
    return bb


def global_attention_forward(x, w_qkv, w_proj, b_proj, *, num_heads):
    """Pallas forward matching GlobalAttention.forward (dropout = identity / eval).

    x: (B, N, C); w_qkv: (C, 3C) [y = x @ w_qkv]; w_proj: (C, C); b_proj: (C,)
    """
    B, N, C = x.shape
    H = num_heads
    assert C % H == 0 and N % H == 0, "C and N must be divisible by num_heads"
    D = C // H
    A = N // H
    J = H * H * D
    scale = C ** (-0.5)                 # module quirk: dim**-0.5, NOT head_dim**-0.5
    f32 = jnp.float32

    Bb = _batches_per_block(B, N)       # pack ~128 tokens per grid step when possible
    L = Bb * N
    # TODO(synk): for very large N the (L, L) lane-collapse matrix grows as L^2; re-derive
    # the token tile / switch to an in-kernel block transpose if this kernel is reused there.

    # ---------------- host-built constants (DMA'd once, VMEM-resident) ----------------
    j = jnp.arange(J)
    h_j = j // (H * D)
    g_j = (j % (H * D)) // D
    d_j = j % D

    wt = w_qkv.T.astype(f32)                                           # (3C, C)
    w_exp = jnp.concatenate(
        [scale * wt[D * h_j + d_j, :],                                 # q block (scale folded)
         wt[C + D * g_j + d_j, :],                                     # k block
         wt[2 * C + D * g_j + d_j, :]], axis=0)                        # v block   -> (3J, C)

    ms = jnp.arange(H * H)
    g_m, h_m = ms // H, ms % H                                         # g-major softmax rows
    rs = ((h_j[None, :] == h_m[:, None]) &
          (g_j[None, :] == g_m[:, None])).astype(f32)                  # (H*H, J)
    ep = (ms[None, :] == (H * g_j + h_j)[:, None]).astype(f32)         # (J, H*H)

    rr = jnp.arange(H * C)
    e_r = rr // (H * D)
    h_r = (rr % (H * D)) // D
    d_r = rr % D
    eot = ((h_j[None, :] == h_r[:, None]) &
           (d_j[None, :] == d_r[:, None])).astype(f32)                 # (H*C, J)

    lanes = jnp.arange(L)
    b_lane = lanes // N
    e_in = lanes % H                    # input token n = a*H + e  -> e
    a_in = (lanes % N) // H             #                          -> a
    h_out = (lanes % N) // A            # output token m = h*A + a -> h
    a_out = (lanes % N) % A             #                          -> a
    mask_e = (e_r[:, None] == e_in[None, :]).astype(f32)               # (H*C, L)
    mask_h = (h_r[:, None] == h_out[None, :]).astype(f32)              # (H*C, L)
    qmat = ((b_lane[:, None] == b_lane[None, :]) &
            (a_in[:, None] == a_out[None, :])).astype(f32)             # (L, L)

    ws = w_proj[e_r * D + d_r, :].T.astype(f32)                        # (C, H*C) h-tiled proj
    b_col = b_proj.reshape(C, 1).astype(f32)

    x2d = x.reshape(B * N, C).astype(f32)                              # free reshape, no copy

    kern = functools.partial(_global_attention_kernel, num_heads=H)
    out_cn = pl.pallas_call(
        kern,
        out_shape=jax.ShapeDtypeStruct((C, B * N), jnp.float32),
        grid_spec=pltpu.PrefetchScalarGridSpec(
            num_scalar_prefetch=0,
            grid=(B // Bb,),
            in_specs=[
                pl.BlockSpec((L, C), lambda i: (i, 0)),          # token tile
                pl.BlockSpec((3 * J, C), lambda i: (0, 0)),      # W_exp        (resident)
                pl.BlockSpec((H * H, J), lambda i: (0, 0)),      # RS           (resident)
                pl.BlockSpec((J, H * H), lambda i: (0, 0)),      # EP           (resident)
                pl.BlockSpec((H * C, J), lambda i: (0, 0)),      # EOT          (resident)
                pl.BlockSpec((H * C, L), lambda i: (0, 0)),      # mask_e       (resident)
                pl.BlockSpec((L, L), lambda i: (0, 0)),          # Q            (resident)
                pl.BlockSpec((H * C, L), lambda i: (0, 0)),      # mask_h       (resident)
                pl.BlockSpec((C, H * C), lambda i: (0, 0)),      # WS           (resident)
                pl.BlockSpec((C, 1), lambda i: (0, 0)),          # bias         (resident)
            ],
            out_specs=pl.BlockSpec((C, L), lambda i: (0, i)),    # lane-dense output block
        ),
        compiler_params=pltpu.CompilerParams(
            dimension_semantics=("parallel",)),
    )(x2d, w_exp, rs, ep, eot, mask_e, qmat, mask_h, ws, b_col)

    # columns are ordered (batch, output-token); one cheap host reorder to (B, N, C).
    return out_cn.reshape(C, B, N).transpose(1, 2, 0)


# --------------------------------------------------------------- pure-JAX reference
def reference_forward(x, w_qkv, w_proj, b_proj, *, num_heads):
    B, N, C = x.shape
    H = num_heads
    D = C // H
    scale = C ** (-0.5)
    hi = jax.lax.Precision.HIGHEST
    qkv = jnp.einsum('bnc,ck->bnk', x, w_qkv, precision=hi).reshape(B, N, 3, H, D)
    q, k, v = qkv[:, :, 0], qkv[:, :, 1], qkv[:, :, 2]
    attn = jnp.einsum('bnhd,bngd->bnhg', q, k, precision=hi) * scale
    attn = jax.nn.softmax(attn, axis=-1)
    out = jnp.einsum('bnhg,bngd->bnhd', attn, v, precision=hi)
    out = out.transpose(0, 2, 1, 3).reshape(B, N, C)
    return jnp.einsum('bnc,cd->bnd', out, w_proj, precision=hi) + b_proj


if __name__ == "__main__":
    B, N, C, H = 2, 64, 32, 8
    key = jax.random.PRNGKey(0)
    kx, kq, kp, kb = jax.random.split(key, 4)
    x = jax.random.normal(kx, (B, N, C), jnp.float32)
    # deterministic synthetic params: nn.Linear(C, 3C, bias=False), nn.Linear(C, C)
    w_qkv = jax.random.normal(kq, (C, 3 * C), jnp.float32) * (C ** -0.5)
    w_proj = jax.random.normal(kp, (C, C), jnp.float32) * (C ** -0.5)
    b_proj = jax.random.normal(kb, (C,), jnp.float32) * 0.01

    out = global_attention_forward(x, w_qkv, w_proj, b_proj, num_heads=H)
    out = jax.block_until_ready(out)

    ref = reference_forward(x, w_qkv, w_proj, b_proj, num_heads=H)
    assert out.shape == (B, N, C)
    err = float(jnp.max(jnp.abs(out - ref)))
    assert jnp.allclose(out, ref, rtol=5e-2, atol=5e-2), f"max abs err = {err}"
    print("KERNEL_OK")
</pallas_src>

<mosaic_0001>
module attributes {stable_mosaic.version = 11 : i64} {
  func.func @_global_attention_kernel(%arg0: i32, %arg1: memref<128x32xf32, #tpu.memory_space<vmem>>, %arg2: memref<768x32xf32, #tpu.memory_space<vmem>>, %arg3: memref<64x256xf32, #tpu.memory_space<vmem>>, %arg4: memref<256x64xf32, #tpu.memory_space<vmem>>, %arg5: memref<256x256xf32, #tpu.memory_space<vmem>>, %arg6: memref<256x128xf32, #tpu.memory_space<vmem>>, %arg7: memref<128x128xf32, #tpu.memory_space<vmem>>, %arg8: memref<256x128xf32, #tpu.memory_space<vmem>>, %arg9: memref<32x256xf32, #tpu.memory_space<vmem>>, %arg10: memref<32x1xf32, #tpu.memory_space<vmem>>, %arg11: memref<32x128xf32, #tpu.memory_space<vmem>>) attributes {dimension_semantics = [#tpu.dimension_semantics<parallel>], iteration_bounds = array<i64: 1>, scalar_prefetch = 0 : i64, scratch_operands = 0 : i64, tpu.core_type = #tpu.core_type<tc>, window_params = [{transform_indices = @transform_0, window_bounds = array<i64: 128, 32>}, {pipeline_mode = #tpu.pipeline_mode<synchronous>, transform_indices = @transform_1, window_bounds = array<i64: 768, 32>}, {pipeline_mode = #tpu.pipeline_mode<synchronous>, transform_indices = @transform_2, window_bounds = array<i64: 64, 256>}, {pipeline_mode = #tpu.pipeline_mode<synchronous>, transform_indices = @transform_3, window_bounds = array<i64: 256, 64>}, {pipeline_mode = #tpu.pipeline_mode<synchronous>, transform_indices = @transform_4, window_bounds = array<i64: 256, 256>}, {pipeline_mode = #tpu.pipeline_mode<synchronous>, transform_indices = @transform_5, window_bounds = array<i64: 256, 128>}, {pipeline_mode = #tpu.pipeline_mode<synchronous>, transform_indices = @transform_6, window_bounds = array<i64: 128, 128>}, {pipeline_mode = #tpu.pipeline_mode<synchronous>, transform_indices = @transform_7, window_bounds = array<i64: 256, 128>}, {pipeline_mode = #tpu.pipeline_mode<synchronous>, transform_indices = @transform_8, window_bounds = array<i64: 32, 256>}, {pipeline_mode = #tpu.pipeline_mode<synchronous>, transform_indices = @transform_9, window_bounds = array<i64: 32, 1>}, {transform_indices = @transform_10, window_bounds = array<i64: 32, 128>}]} {
    %c0 = arith.constant 0 : index
    %c0_0 = arith.constant 0 : index
    %0 = vector.load %arg1[%c0, %c0_0] : memref<128x32xf32, #tpu.memory_space<vmem>>, vector<128x32xf32>
    %1 = tpu.transpose %0, [1, 0] : vector<128x32xf32> -> vector<32x128xf32>
    %c0_1 = arith.constant 0 : index
    %c0_2 = arith.constant 0 : index
    %2 = vector.load %arg2[%c0_1, %c0_2] : memref<768x32xf32, #tpu.memory_space<vmem>>, vector<768x32xf32>
    %cst = arith.constant dense<0.000000e+00> : vector<768x128xf32>
    %3 = tpu.matmul %2, %1, %cst {dimension_numbers = #tpu.dot_dimension_numbers<[1], [0], [0], [1], [0, 0, 1, 1], [], []>} : vector<768x32xf32>, vector<32x128xf32>, vector<768x128xf32> -> vector<768x128xf32>
    %4 = vector.extract_strided_slice %3 {offsets = [0, 0], sizes = [256, 128], strides = [1, 1]} : vector<768x128xf32> to vector<256x128xf32>
    %5 = vector.extract_strided_slice %3 {offsets = [256, 0], sizes = [256, 128], strides = [1, 1]} : vector<768x128xf32> to vector<256x128xf32>
    %6 = vector.extract_strided_slice %3 {offsets = [512, 0], sizes = [256, 128], strides = [1, 1]} : vector<768x128xf32> to vector<256x128xf32>
    %c0_3 = arith.constant 0 : index
    %c0_4 = arith.constant 0 : index
    %7 = vector.load %arg3[%c0_3, %c0_4] : memref<64x256xf32, #tpu.memory_space<vmem>>, vector<64x256xf32>
    %8 = arith.mulf %4, %5 : vector<256x128xf32>
    %cst_5 = arith.constant dense<0.000000e+00> : vector<64x128xf32>
    %9 = tpu.matmul %7, %8, %cst_5 {dimension_numbers = #tpu.dot_dimension_numbers<[1], [0], [0], [1], [0, 0, 1, 1], [], []>} : vector<64x256xf32>, vector<256x128xf32>, vector<64x128xf32> -> vector<64x128xf32>
    %10 = vector.shape_cast %9 : vector<64x128xf32> to vector<8x8x128xf32>
    %cst_6 = arith.constant dense<0xFF800000> : vector<8x128xf32>
    %11 = vector.multi_reduction <maximumf>, %10, %cst_6 [0] : vector<8x8x128xf32> to vector<8x128xf32>
    %12 = vector.shape_cast %11 : vector<8x128xf32> to vector<1x8x128xf32>
    %13 = vector.broadcast %12 : vector<1x8x128xf32> to vector<8x8x128xf32>
    %14 = arith.subf %10, %13 : vector<8x8x128xf32>
    %15 = math.exp %14 : vector<8x8x128xf32>
    %cst_7 = arith.constant dense<0.000000e+00> : vector<8x128xf32>
    %16 = vector.multi_reduction <add>, %15, %cst_7 [0] : vector<8x8x128xf32> to vector<8x128xf32>
    %17 = tpu.reciprocal %16 {approx = true} : vector<8x128xf32> -> vector<8x128xf32>
    %18 = vector.shape_cast %17 : vector<8x128xf32> to vector<1x8x128xf32>
    %19 = vector.broadcast %18 : vector<1x8x128xf32> to vector<8x8x128xf32>
    %20 = arith.mulf %15, %19 : vector<8x8x128xf32>
    %21 = vector.shape_cast %20 : vector<8x8x128xf32> to vector<64x128xf32>
    %c0_8 = arith.constant 0 : index
    %c0_9 = arith.constant 0 : index
    %22 = vector.load %arg4[%c0_8, %c0_9] : memref<256x64xf32, #tpu.memory_space<vmem>>, vector<256x64xf32>
    %cst_10 = arith.constant dense<0.000000e+00> : vector<256x128xf32>
    %23 = tpu.matmul %22, %21, %cst_10 {dimension_numbers = #tpu.dot_dimension_numbers<[1], [0], [0], [1], [0, 0, 1, 1], [], []>} : vector<256x64xf32>, vector<64x128xf32>, vector<256x128xf32> -> vector<256x128xf32>
    %c0_11 = arith.constant 0 : index
    %c0_12 = arith.constant 0 : index
    %24 = vector.load %arg5[%c0_11, %c0_12] : memref<256x256xf32, #tpu.memory_space<vmem>>, vector<256x256xf32>
    %25 = arith.mulf %23, %6 : vector<256x128xf32>
    %cst_13 = arith.constant dense<0.000000e+00> : vector<256x128xf32>
    %26 = tpu.matmul %24, %25, %cst_13 {dimension_numbers = #tpu.dot_dimension_numbers<[1], [0], [0], [1], [0, 0, 1, 1], [], []>} : vector<256x256xf32>, vector<256x128xf32>, vector<256x128xf32> -> vector<256x128xf32>
    %c0_14 = arith.constant 0 : index
    %c0_15 = arith.constant 0 : index
    %27 = vector.load %arg6[%c0_14, %c0_15] : memref<256x128xf32, #tpu.memory_space<vmem>>, vector<256x128xf32>
    %28 = arith.mulf %26, %27 : vector<256x128xf32>
    %c0_16 = arith.constant 0 : index
    %c0_17 = arith.constant 0 : index
    %29 = vector.load %arg7[%c0_16, %c0_17] : memref<128x128xf32, #tpu.memory_space<vmem>>, vector<128x128xf32>
    %cst_18 = arith.constant dense<0.000000e+00> : vector<256x128xf32>
    %30 = tpu.matmul %28, %29, %cst_18 {dimension_numbers = #tpu.dot_dimension_numbers<[1], [0], [0], [1], [0, 0, 1, 1], [], []>} : vector<256x128xf32>, vector<128x128xf32>, vector<256x128xf32> -> vector<256x128xf32>
    %c0_19 = arith.constant 0 : index
    %c0_20 = arith.constant 0 : index
    %31 = vector.load %arg9[%c0_19, %c0_20] : memref<32x256xf32, #tpu.memory_space<vmem>>, vector<32x256xf32>
    %c0_21 = arith.constant 0 : index
    %c0_22 = arith.constant 0 : index
    %32 = vector.load %arg8[%c0_21, %c0_22] : memref<256x128xf32, #tpu.memory_space<vmem>>, vector<256x128xf32>
    %33 = arith.mulf %30, %32 : vector<256x128xf32>
    %cst_23 = arith.constant dense<0.000000e+00> : vector<32x128xf32>
    %34 = tpu.matmul %31, %33, %cst_23 {dimension_numbers = #tpu.dot_dimension_numbers<[1], [0], [0], [1], [0, 0, 1, 1], [], []>} : vector<32x256xf32>, vector<256x128xf32>, vector<32x128xf32> -> vector<32x128xf32>
    %c0_24 = arith.constant 0 : index
    %c0_25 = arith.constant 0 : index
    %35 = vector.load %arg10[%c0_24, %c0_25] : memref<32x1xf32, #tpu.memory_space<vmem>>, vector<32x1xf32>
    %36 = vector.broadcast %35 : vector<32x1xf32> to vector<32x128xf32>
    %37 = arith.addf %34, %36 : vector<32x128xf32>
    %c0_26 = arith.constant 0 : index
    %c0_27 = arith.constant 0 : index
    %38 = vector.load %arg11[%c0_26, %c0_27] : memref<32x128xf32, #tpu.memory_space<vmem>>, vector<32x128xf32>
    tpu.vector_store %arg11[%c0_26, %c0_27], %37 {strides = array<i32>} : memref<32x128xf32, #tpu.memory_space<vmem>>, vector<32x128xf32>,
    return
  }
  func.func @transform_0(%arg0: i32) -> (i32, i32) {
    %c0_i32 = arith.constant 0 : i32
    %c0_i32_0 = arith.constant 0 : i32
    return %arg0, %c0_i32 : i32, i32
  }
  func.func @transform_1(%arg0: i32) -> (i32, i32) {
    %c0_i32 = arith.constant 0 : i32
    %c0_i32_0 = arith.constant 0 : i32
    %c0_i32_1 = arith.constant 0 : i32
    return %c0_i32, %c0_i32_0 : i32, i32
  }
  func.func @transform_2(%arg0: i32) -> (i32, i32) {
    %c0_i32 = arith.constant 0 : i32
    %c0_i32_0 = arith.constant 0 : i32
    %c0_i32_1 = arith.constant 0 : i32
    return %c0_i32, %c0_i32_0 : i32, i32
  }
  func.func @transform_3(%arg0: i32) -> (i32, i32) {
    %c0_i32 = arith.constant 0 : i32
    %c0_i32_0 = arith.constant 0 : i32
    %c0_i32_1 = arith.constant 0 : i32
    return %c0_i32, %c0_i32_0 : i32, i32
  }
  func.func @transform_4(%arg0: i32) -> (i32, i32) {
    %c0_i32 = arith.constant 0 : i32
    %c0_i32_0 = arith.constant 0 : i32
    %c0_i32_1 = arith.constant 0 : i32
    return %c0_i32, %c0_i32_0 : i32, i32
  }
  func.func @transform_5(%arg0: i32) -> (i32, i32) {
    %c0_i32 = arith.constant 0 : i32
    %c0_i32_0 = arith.constant 0 : i32
    %c0_i32_1 = arith.constant 0 : i32
    return %c0_i32, %c0_i32_0 : i32, i32
  }
  func.func @transform_6(%arg0: i32) -> (i32, i32) {
    %c0_i32 = arith.constant 0 : i32
    %c0_i32_0 = arith.constant 0 : i32
    %c0_i32_1 = arith.constant 0 : i32
    return %c0_i32, %c0_i32_0 : i32, i32
  }
  func.func @transform_7(%arg0: i32) -> (i32, i32) {
    %c0_i32 = arith.constant 0 : i32
    %c0_i32_0 = arith.constant 0 : i32
    %c0_i32_1 = arith.constant 0 : i32
    return %c0_i32, %c0_i32_0 : i32, i32
  }
  func.func @transform_8(%arg0: i32) -> (i32, i32) {
    %c0_i32 = arith.constant 0 : i32
    %c0_i32_0 = arith.constant 0 : i32
    %c0_i32_1 = arith.constant 0 : i32
    return %c0_i32, %c0_i32_0 : i32, i32
  }
  func.func @transform_9(%arg0: i32) -> (i32, i32) {
    %c0_i32 = arith.constant 0 : i32
    %c0_i32_0 = arith.constant 0 : i32
    %c0_i32_1 = arith.constant 0 : i32
    return %c0_i32, %c0_i32_0 : i32, i32
  }
  func.func @transform_10(%arg0: i32) -> (i32, i32) {
    %c0_i32 = arith.constant 0 : i32
    %c0_i32_0 = arith.constant 0 : i32
    return %c0_i32, %arg0 : i32, i32
  }
}

</mosaic_0001>

<llo_original>
// kernel: tpu_custom_call.1
$region0: #{tpu_custom_call.1}
  #allocation0 [shape = 'u32[]', space=smem, size = 0x4, offset = 0x4, fixed_abs, tag = 'smem constant byte address 0x4 - core index']
  #allocation1 [shape = 'u32[144,128]{1,0:T(1,128)}', space=vmem, size = 0x12000, scoped, tag = 'internal scratch']
  %s0 = inlined_call_operand.vmem [shape: f32[128,32], index: 0, kind: input, shape index: {}]
  %s1 = inlined_call_operand.vmem [shape: f32[768,32], index: 1, kind: input, shape index: {}]
  %s2 = inlined_call_operand.vmem [shape: f32[64,256], index: 2, kind: input, shape index: {}]
  %s3 = inlined_call_operand.vmem [shape: f32[256,64], index: 3, kind: input, shape index: {}]
  %s4 = inlined_call_operand.vmem [shape: f32[256,256], index: 4, kind: input, shape index: {}]
  %s5 = inlined_call_operand.vmem [shape: f32[256,128], index: 5, kind: input, shape index: {}]
  %s6 = inlined_call_operand.hbm [shape: f32[128,128], index: 6, kind: input, shape index: {}]
  %s7 = inlined_call_operand.vmem [shape: f32[256,128], index: 7, kind: input, shape index: {}]
  %s8 = inlined_call_operand.vmem [shape: f32[32,256], index: 8, kind: input, shape index: {}]
  %s9 = inlined_call_operand.vmem [shape: f32[32,1], index: 9, kind: input, shape index: {}]
  %s10 = inlined_call_operand.hbm [shape: f32[32,128], index: 10, kind: output, shape index: {}]
  %s11 = sld [smem:[#allocation0]]
  $region54: #{tpu_custom_call.1} parent=0
    _
  %s13 = ssub.s32 1, %s11
  %s14 = scalar_select 0, %s13, %s11
  $region1: #{tpu_custom_call.1} parent=0
    #allocation2 [shape = 'u8[65536]{0}', space=vmem, size = 0x10000, scoped, tag = 'input window, operand 6, single buffered']
    #allocation3 [shape = 's32[1]{0}', space=sflag, size = 0x4, scoped, tag = 'scoped memory for tpu_custom_call.1']
    #allocation4 [shape = 's32[1]{0}', space=sflag, size = 0x4, scoped, tag = 'scoped memory for tpu_custom_call.1']
    #allocation5 [shape = 'u8[16384]{0}', space=vmem, size = 0x4000, scoped, tag = 'output window, operand 0, single buffered']
    %15 = vsyncpa [#allocation3], 0
    %16 = vsyncpa [#allocation4], 0
    // Predicated region
    $region2: #{tpu_custom_call.1} parent=1 // pred_check
      _
    $region3: #{tpu_custom_call.1} parent=1 // pred_check_branch
      %18 = sbr.rel (0) target = $region5
    $region4: #{tpu_custom_call.1} parent=1 // pred_region
      _
    $region5: #{tpu_custom_call.1} parent=1 // pred_fallthru
      _
    // Predicated region
    $region6: #{tpu_custom_call.1} parent=1 // pred_check
      _
    $region7: #{tpu_custom_call.1} parent=1 // pred_check_branch
      %20 = sbr.rel (0) target = $region9
    $region8: #{tpu_custom_call.1} parent=1 // pred_region
      _
    $region9: #{tpu_custom_call.1} parent=1 // pred_fallthru
      _
    // Predicated region
    $region10: #{tpu_custom_call.1} parent=1 // pred_check
      _
    $region11: #{tpu_custom_call.1} parent=1 // pred_check_branch
      %22 = sbr.rel (0) target = $region13
    $region12: #{tpu_custom_call.1} parent=1 // pred_region
      _
    $region13: #{tpu_custom_call.1} parent=1 // pred_fallthru
      _
    // Predicated region
    $region14: #{tpu_custom_call.1} parent=1 // pred_check
      _
    $region15: #{tpu_custom_call.1} parent=1 // pred_check_branch
      %24 = sbr.rel (0) target = $region17
    $region16: #{tpu_custom_call.1} parent=1 // pred_region
      _
    $region17: #{tpu_custom_call.1} parent=1 // pred_fallthru
      _
    // Predicated region
    $region18: #{tpu_custom_call.1} parent=1 // pred_check
      _
    $region19: #{tpu_custom_call.1} parent=1 // pred_check_branch
      %26 = sbr.rel (0) target = $region21
    $region20: #{tpu_custom_call.1} parent=1 // pred_region
      _
    $region21: #{tpu_custom_call.1} parent=1 // pred_fallthru
      _
    // Predicated region
    $region22: #{tpu_custom_call.1} parent=1 // pred_check
      _
    $region23: #{tpu_custom_call.1} parent=1 // pred_check_branch
      %28 = sbr.rel (0) target = $region25
    $region24: #{tpu_custom_call.1} parent=1 // pred_region
      _
    $region25: #{tpu_custom_call.1} parent=1 // pred_fallthru
      _
    // Predicated region
    $region26: #{tpu_custom_call.1} parent=1 // pred_check
      _
    $region27: #{tpu_custom_call.1} parent=1 // pred_check_branch
      %30 = sbr.rel (0) target = $region29
    $region28: #{tpu_custom_call.1} parent=1 // pred_region
      %s32 = ssub.s32 2048, 2048
      %33 = vsyncadd [#allocation3], %s32
      %s34 = sshll.u32 [#allocation2], 4
      %s35 = int_to_ptr.vmem [resolvable:$true] %s34
      %40 = dma.hbm_to_vmem [thread:$0]  %s6, 2048, %s35, [#allocation3], 128, 128, 8
    $region29: #{tpu_custom_call.1} parent=1 // pred_fallthru
      _
    // Predicated region
    $region30: #{tpu_custom_call.1} parent=1 // pred_check
      _
    $region31: #{tpu_custom_call.1} parent=1 // pred_check_branch
      %42 = sbr.rel (0) target = $region33
    $region32: #{tpu_custom_call.1} parent=1 // pred_region
      _
    $region33: #{tpu_custom_call.1} parent=1 // pred_fallthru
      _
    // Predicated region
    $region34: #{tpu_custom_call.1} parent=1 // pred_check
      _
    $region35: #{tpu_custom_call.1} parent=1 // pred_check_branch
      %44 = sbr.rel (0) target = $region37
    $region36: #{tpu_custom_call.1} parent=1 // pred_region
      _
    $region37: #{tpu_custom_call.1} parent=1 // pred_fallthru
      _
    // Predicated region
    $region38: #{tpu_custom_call.1} parent=1 // pred_check
      _
    $region39: #{tpu_custom_call.1} parent=1 // pred_check_branch
      %46 = sbr.rel (0) target = $region41
    $region40: #{tpu_custom_call.1} parent=1 // pred_region
      _
    $region41: #{tpu_custom_call.1} parent=1 // pred_fallthru
      _
    // Predicated region
    $region42: #{tpu_custom_call.1} parent=1 // pred_check
      _
    $region43: #{tpu_custom_call.1} parent=1 // pred_check_branch
      %48 = sbr.rel (0) target = $region45
    $region44: #{tpu_custom_call.1} parent=1 // pred_region
      %49 = dma.done [#allocation3], 2048
    $region45: #{tpu_custom_call.1} parent=1 // pred_fallthru
      _
    %v50 = vld [vmem:[%s0] sm:$0xff]
    %v51 = vld [vmem:[%s0 + $0x8] sm:$0xff]
    %v52 = vld [vmem:[%s0 + $0x10] sm:$0xff]
    %v53 = vld [vmem:[%s0 + $0x18] sm:$0xff]
    %v54 = vld [vmem:[%s0 + $0x20] sm:$0xff]
    %v55 = vld [vmem:[%s0 + $0x28] sm:$0xff]
    %v56 = vld [vmem:[%s0 + $0x30] sm:$0xff]
    %v57 = vld [vmem:[%s0 + $0x38] sm:$0xff]
    %v58 = vld [vmem:[%s0 + $0x40] sm:$0xff]
    %v59 = vld [vmem:[%s0 + $0x48] sm:$0xff]
    %v60 = vld [vmem:[%s0 + $0x50] sm:$0xff]
    %v61 = vld [vmem:[%s0 + $0x58] sm:$0xff]
    %v62 = vld [vmem:[%s0 + $0x60] sm:$0xff]
    %v63 = vld [vmem:[%s0 + $0x68] sm:$0xff]
    %v64 = vld [vmem:[%s0 + $0x70] sm:$0xff]
    %v65 = vld [vmem:[%s0 + $0x78] sm:$0xff]
    %v66 = vld [vmem:[%s1] sm:$0xff]
    %v67 = vld [vmem:[%s1 + $0x8] sm:$0xff]
    %v68 = vld [vmem:[%s1 + $0x10] sm:$0xff]
    %v69 = vld [vmem:[%s1 + $0x18] sm:$0xff]
    %v70 = vld [vmem:[%s1 + $0x20] sm:$0xff]
    %v71 = vld [vmem:[%s1 + $0x28] sm:$0xff]
    %v72 = vld [vmem:[%s1 + $0x30] sm:$0xff]
    %v73 = vld [vmem:[%s1 + $0x38] sm:$0xff]
    %v74 = vld [vmem:[%s1 + $0x40] sm:$0xff]
    %v75 = vld [vmem:[%s1 + $0x48] sm:$0xff]
    %v76 = vld [vmem:[%s1 + $0x50] sm:$0xff]
    %v77 = vld [vmem:[%s1 + $0x58] sm:$0xff]
    %v78 = vld [vmem:[%s1 + $0x60] sm:$0xff]
    %v79 = vld [vmem:[%s1 + $0x68] sm:$0xff]
    %v80 = vld [vmem:[%s1 + $0x70] sm:$0xff]
    %v81 = vld [vmem:[%s1 + $0x78] sm:$0xff]
    %v82 = vld [vmem:[%s1 + $0x80] sm:$0xff]
    %v83 = vld [vmem:[%s1 + $0x88] sm:$0xff]
    %v84 = vld [vmem:[%s1 + $0x90] sm:$0xff]
    %v85 = vld [vmem:[%s1 + $0x98] sm:$0xff]
    %v86 = vld [vmem:[%s1 + $0xa0] sm:$0xff]
    %v87 = vld [vmem:[%s1 + $0xa8] sm:$0xff]
    %v88 = vld [vmem:[%s1 + $0xb0] sm:$0xff]
    %v89 = vld [vmem:[%s1 + $0xb8] sm:$0xff]
    %v90 = vld [vmem:[%s1 + $0xc0] sm:$0xff]
    %v91 = vld [vmem:[%s1 + $0xc8] sm:$0xff]
    %v92 = vld [vmem:[%s1 + $0xd0] sm:$0xff]
    %v93 = vld [vmem:[%s1 + $0xd8] sm:$0xff]
    %v94 = vld [vmem:[%s1 + $0xe0] sm:$0xff]
    %v95 = vld [vmem:[%s1 + $0xe8] sm:$0xff]
    %v96 = vld [vmem:[%s1 + $0xf0] sm:$0xff]
    %v97 = vld [vmem:[%s1 + $0xf8] sm:$0xff]
    %v98 = vld [vmem:[%s1 + $0x100] sm:$0xff]
    %v99 = vld [vmem:[%s1 + $0x108] sm:$0xff]
    %v100 = vld [vmem:[%s1 + $0x110] sm:$0xff]
    %v101 = vld [vmem:[%s1 + $0x118] sm:$0xff]
    %v102 = vld [vmem:[%s1 + $0x120] sm:$0xff]
    %v103 = vld [vmem:[%s1 + $0x128] sm:$0xff]
    %v104 = vld [vmem:[%s1 + $0x130] sm:$0xff]
    %v105 = vld [vmem:[%s1 + $0x138] sm:$0xff]
    %v106 = vld [vmem:[%s1 + $0x140] sm:$0xff]
    %v107 = vld [vmem:[%s1 + $0x148] sm:$0xff]
    %v108 = vld [vmem:[%s1 + $0x150] sm:$0xff]
    %v109 = vld [vmem:[%s1 + $0x158] sm:$0xff]
    %v110 = vld [vmem:[%s1 + $0x160] sm:$0xff]
    %v111 = vld [vmem:[%s1 + $0x168] sm:$0xff]
    %v112 = vld [vmem:[%s1 + $0x170] sm:$0xff]
    %v113 = vld [vmem:[%s1 + $0x178] sm:$0xff]
    %v114 = vld [vmem:[%s1 + $0x180] sm:$0xff]
    %v115 = vld [vmem:[%s1 + $0x188] sm:$0xff]
    %v116 = vld [vmem:[%s1 + $0x190] sm:$0xff]
    %v117 = vld [vmem:[%s1 + $0x198] sm:$0xff]
    %v118 = vld [vmem:[%s1 + $0x1a0] sm:$0xff]
    %v119 = vld [vmem:[%s1 + $0x1a8] sm:$0xff]
    %v120 = vld [vmem:[%s1 + $0x1b0] sm:$0xff]
    %v121 = vld [vmem:[%s1 + $0x1b8] sm:$0xff]
    %v122 = vld [vmem:[%s1 + $0x1c0] sm:$0xff]
    %v123 = vld [vmem:[%s1 + $0x1c8] sm:$0xff]
    %v124 = vld [vmem:[%s1 + $0x1d0] sm:$0xff]
    %v125 = vld [vmem:[%s1 + $0x1d8] sm:$0xff]
    %v126 = vld [vmem:[%s1 + $0x1e0] sm:$0xff]
    %v127 = vld [vmem:[%s1 + $0x1e8] sm:$0xff]
    %v128 = vld [vmem:[%s1 + $0x1f0] sm:$0xff]
    %v129 = vld [vmem:[%s1 + $0x1f8] sm:$0xff]
    %v130 = vld [vmem:[%s1 + $0x200] sm:$0xff]
    %v131 = vld [vmem:[%s1 + $0x208] sm:$0xff]
    %v132 = vld [vmem:[%s1 + $0x210] sm:$0xff]
    %v133 = vld [vmem:[%s1 + $0x218] sm:$0xff]
    %v134 = vld [vmem:[%s1 + $0x220] sm:$0xff]
    %v135 = vld [vmem:[%s1 + $0x228] sm:$0xff]
    %v136 = vld [vmem:[%s1 + $0x230] sm:$0xff]
    %v137 = vld [vmem:[%s1 + $0x238] sm:$0xff]
    %v138 = vld [vmem:[%s1 + $0x240] sm:$0xff]
    %v139 = vld [vmem:[%s1 + $0x248] sm:$0xff]
    %v140 = vld [vmem:[%s1 + $0x250] sm:$0xff]
    %v141 = vld [vmem:[%s1 + $0x258] sm:$0xff]
    %v142 = vld [vmem:[%s1 + $0x260] sm:$0xff]
    %v143 = vld [vmem:[%s1 + $0x268] sm:$0xff]
    %v144 = vld [vmem:[%s1 + $0x270] sm:$0xff]
    %v145 = vld [vmem:[%s1 + $0x278] sm:$0xff]
    %v146 = vld [vmem:[%s1 + $0x280] sm:$0xff]
    %v147 = vld [vmem:[%s1 + $0x288] sm:$0xff]
    %v148 = vld [vmem:[%s1 + $0x290] sm:$0xff]
    %v149 = vld [vmem:[%s1 + $0x298] sm:$0xff]
    %v150 = vld [vmem:[%s1 + $0x2a0] sm:$0xff]
    %v151 = vld [vmem:[%s1 + $0x2a8] sm:$0xff]
    %v152 = vld [vmem:[%s1 + $0x2b0] sm:$0xff]
    %v153 = vld [vmem:[%s1 + $0x2b8] sm:$0xff]
    %v154 = vld [vmem:[%s1 + $0x2c0] sm:$0xff]
    %v155 = vld [vmem:[%s1 + $0x2c8] sm:$0xff]
    %v156 = vld [vmem:[%s1 + $0x2d0] sm:$0xff]
    %v157 = vld [vmem:[%s1 + $0x2d8] sm:$0xff]
    %v158 = vld [vmem:[%s1 + $0x2e0] sm:$0xff]
    %v159 = vld [vmem:[%s1 + $0x2e8] sm:$0xff]
    %v160 = vld [vmem:[%s1 + $0x2f0] sm:$0xff]
    %v161 = vld [vmem:[%s1 + $0x2f8] sm:$0xff]
    %vm162 = vcmask 261120
    %v164 = vsel %vm162, %v66, 0
    %v167 = vsel %vm162, %v67, 0
    %v170 = vsel %vm162, %v68, 0
    %v173 = vsel %vm162, %v69, 0
    %v176 = vsel %vm162, %v70, 0
    %v179 = vsel %vm162, %v71, 0
    %v182 = vsel %vm162, %v72, 0
    %v185 = vsel %vm162, %v73, 0
    %v188 = vsel %vm162, %v74, 0
    %v191 = vsel %vm162, %v75, 0
    %v194 = vsel %vm162, %v76, 0
    %v197 = vsel %vm162, %v77, 0
    %v200 = vsel %vm162, %v78, 0
    %v203 = vsel %vm162, %v79, 0
    %v206 = vsel %vm162, %v80, 0
    %v209 = vsel %vm162, %v81, 0
    %v212 = vsel %vm162, %v82, 0
    %v215 = vsel %vm162, %v83, 0
    %v218 = vsel %vm162, %v84, 0
    %v221 = vsel %vm162, %v85, 0
    %v224 = vsel %vm162, %v86, 0
    %v227 = vsel %vm162, %v87, 0
    %v230 = vsel %vm162, %v88, 0
    %v233 = vsel %vm162, %v89, 0
    %v236 = vsel %vm162, %v90, 0
    %v239 = vsel %vm162, %v91, 0
    %v242 = vsel %vm162, %v92, 0
    %v245 = vsel %vm162, %v93, 0
    %v248 = vsel %vm162, %v94, 0
    %v251 = vsel %vm162, %v95, 0
    %v254 = vsel %vm162, %v96, 0
    %v257 = vsel %vm162, %v97, 0
    %v260 = vsel %vm162, %v98, 0
    %v263 = vsel %vm162, %v99, 0
    %v266 = vsel %vm162, %v100, 0
    %v269 = vsel %vm162, %v101, 0
    %v272 = vsel %vm162, %v102, 0
    %v275 = vsel %vm162, %v103, 0
    %v278 = vsel %vm162, %v104, 0
    %v281 = vsel %vm162, %v105, 0
    %v284 = vsel %vm162, %v106, 0
    %v287 = vsel %vm162, %v107, 0
    %v290 = vsel %vm162, %v108, 0
    %v293 = vsel %vm162, %v109, 0
    %v296 = vsel %vm162, %v110, 0
    %v299 = vsel %vm162, %v111, 0
    %v302 = vsel %vm162, %v112, 0
    %v305 = vsel %vm162, %v113, 0
    %v308 = vsel %vm162, %v114, 0
    %v311 = vsel %vm162, %v115, 0
    %v314 = vsel %vm162, %v116, 0
    %v317 = vsel %vm162, %v117, 0
    %v320 = vsel %vm162, %v118, 0
    %v323 = vsel %vm162, %v119, 0
    %v326 = vsel %vm162, %v120, 0
    %v329 = vsel %vm162, %v121, 0
    %v332 = vsel %vm162, %v122, 0
    %v335 = vsel %vm162, %v123, 0
    %v338 = vsel %vm162, %v124, 0
    %v341 = vsel %vm162, %v125, 0
    %v344 = vsel %vm162, %v126, 0
    %v347 = vsel %vm162, %v127, 0
    %v350 = vsel %vm162, %v128, 0
    %v353 = vsel %vm162, %v129, 0
    %v356 = vsel %vm162, %v130, 0
    %v359 = vsel %vm162, %v131, 0
    %v362 = vsel %vm162, %v132, 0
    %v365 = vsel %vm162, %v133, 0
    %v368 = vsel %vm162, %v134, 0
    %v371 = vsel %vm162, %v135, 0
    %v374 = vsel %vm162, %v136, 0
    %v377 = vsel %vm162, %v137, 0
    %v380 = vsel %vm162, %v138, 0
    %v383 = vsel %vm162, %v139, 0
    %v386 = vsel %vm162, %v140, 0
    %v389 = vsel %vm162, %v141, 0
    %v392 = vsel %vm162, %v142, 0
    %v395 = vsel %vm162, %v143, 0
    %v398 = vsel %vm162, %v144, 0
    %v401 = vsel %vm162, %v145, 0
    %v404 = vsel %vm162, %v146, 0
    %v407 = vsel %vm162, %v147, 0
    %v410 = vsel %vm162, %v148, 0
    %v413 = vsel %vm162, %v149, 0
    %v416 = vsel %vm162, %v150, 0
    %v419 = vsel %vm162, %v151, 0
    %v422 = vsel %vm162, %v152, 0
    %v425 = vsel %vm162, %v153, 0
    %v428 = vsel %vm162, %v154, 0
    %v431 = vsel %vm162, %v155, 0
    %v434 = vsel %vm162, %v156, 0
    %v437 = vsel %vm162, %v157, 0
    %v440 = vsel %vm162, %v158, 0
    %v443 = vsel %vm162, %v159, 0
    %v446 = vsel %vm162, %v160, 0
    %v449 = vsel %vm162, %v161, 0
    %v452 = vsel %vm162, %v50, 0
    %v455 = vsel %vm162, %v51, 0
    %v458 = vsel %vm162, %v52, 0
    %v461 = vsel %vm162, %v53, 0
    %v464 = vsel %vm162, %v54, 0
    %v467 = vsel %vm162, %v55, 0
    %v470 = vsel %vm162, %v56, 0
    %v473 = vsel %vm162, %v57, 0
    %v476 = vsel %vm162, %v58, 0
    %v479 = vsel %vm162, %v59, 0
    %v482 = vsel %vm162, %v60, 0
    %v485 = vsel %vm162, %v61, 0
    %v488 = vsel %vm162, %v62, 0
    %v491 = vsel %vm162, %v63, 0
    %v494 = vsel %vm162, %v64, 0
    %v497 = vsel %vm162, %v65, 0
    %499 = vmatprep.subr.mxu0 0.0
    %500 = vmatpush1.xpose.msra.mxu0 %v452
    %501 = vmatprep.subr.mxu0 0.0
    %502 = vmatpush1.xpose.msra.mxu0 %v455
    %503 = vmatprep.subr.mxu0 0.0
    %504 = vmatpush1.xpose.msra.mxu0 %v458
    %505 = vmatprep.subr.mxu0 0.0
    %506 = vmatpush1.xpose.msra.mxu0 %v461
    %507 = vmatprep.subr.mxu0 0.0
    %508 = vmatpush1.xpose.msra.mxu0 %v464
    %509 = vmatprep.subr.mxu0 0.0
    %510 = vmatpush1.xpose.msra.mxu0 %v467
    %511 = vmatprep.subr.mxu0 0.0
    %512 = vmatpush1.xpose.msra.mxu0 %v470
    %513 = vmatprep.subr.mxu0 0.0
    %514 = vmatpush1.xpose.msra.mxu0 %v473
    %515 = vmatprep.subr.mxu0 0.0
    %516 = vmatpush1.xpose.msra.mxu0 %v476
    %517 = vmatprep.subr.mxu0 0.0
    %518 = vmatpush1.xpose.msra.mxu0 %v479
    %519 = vmatprep.subr.mxu0 0.0
    %520 = vmatpush1.xpose.msra.mxu0 %v482
    %521 = vmatprep.subr.mxu0 0.0
    %522 = vmatpush1.xpose.msra.mxu0 %v485
    %523 = vmatprep.subr.mxu0 0.0
    %524 = vmatpush1.xpose.msra.mxu0 %v488
    %525 = vmatprep.subr.mxu0 0.0
    %526 = vmatpush1.xpose.msra.mxu0 %v491
    %527 = vmatprep.subr.mxu0 0.0
    %528 = vmatpush1.xpose.msra.mxu0 %v494
    %529 = vmatprep.subr.mxu0 0.0
    %530 = vmatpush1.xpose.msra.mxu0 %v497
    %531 = vmatprep.subr.mxu0 0.0
    %532 = vmatpush1.xpose.msra.mxu0 0.0
    %533 = vmatprep.subr.mxu0 0.0
    %534 = vmatpush1.xpose.msra.mxu0 0.0
    %535 = vmatprep.subr.mxu0 0.0
    %536 = vmatpush1.xpose.msra.mxu0 0.0
    %537 = vmatprep.subr.mxu0 0.0
    %538 = vmatpush1.xpose.msra.mxu0 0.0
    %539 = vmatprep.subr.mxu0 0.0
    %540 = vmatpush1.xpose.msra.mxu0 0.0
    %541 = vmatprep.subr.mxu0 0.0
    %542 = vmatpush1.xpose.msra.mxu0 0.0
    %543 = vmatprep.subr.mxu0 0.0
    %544 = vmatpush1.xpose.msra.mxu0 0.0
    %545 = vmatprep.subr.mxu0 0.0
    %546 = vmatpush1.xpose.msra.mxu0 0.0
    %547 = vmatprep.subr.mxu0 0.0
    %548 = vmatpush1.xpose.msra.mxu0 0.0
    %549 = vmatprep.subr.mxu0 0.0
    %550 = vmatpush1.xpose.msra.mxu0 0.0
    %551 = vmatprep.subr.mxu0 0.0
    %552 = vmatpush1.xpose.msra.mxu0 0.0
    %553 = vmatprep.subr.mxu0 0.0
    %554 = vmatpush1.xpose.msra.mxu0 0.0
    %555 = vmatprep.subr.mxu0 0.0
    %556 = vmatpush1.xpose.msra.mxu0 0.0
    %557 = vmatprep.subr.mxu0 0.0
    %558 = vmatpush1.xpose.msra.mxu0 0.0
    %559 = vmatprep.subr.mxu0 0.0
    %560 = vmatpush1.xpose.msra.mxu0 0.0
    %561 = vmatprep.subr.mxu0 0.0
    %562 = vmatpush1.xpose.msra.mxu0 0.0
    %563 = vmatprep.mubr.f32.mxu0 0.0
    %564 = vmatmul.mubr.f32.gmra.mrb[0].mxu0 %v164
    %v565 = vpop.f32.mrb[0].mxu0
    %v566 = vadd.f32 0.0, %v565
    %v567 = vpop.f32.mrb[0].mxu0
    %568 = vmatprep.mubr.f32.mxu0 0.0
    %569 = vmatmul.mubr.f32.gmra.mrb[0].mxu0 %v167
    %v570 = vpop.f32.mrb[0].mxu0
    %v571 = vadd.f32 0.0, %v570
    %v572 = vpop.f32.mrb[0].mxu0
    %573 = vmatprep.mubr.f32.mxu0 0.0
    %574 = vmatmul.mubr.f32.gmra.mrb[0].mxu0 %v170
    %v575 = vpop.f32.mrb[0].mxu0
    %v576 = vadd.f32 0.0, %v575
    %v577 = vpop.f32.mrb[0].mxu0
    %578 = vmatprep.mubr.f32.mxu0 0.0
    %579 = vmatmul.mubr.f32.gmra.mrb[0].mxu0 %v173
    %v580 = vpop.f32.mrb[0].mxu0
    %v581 = vadd.f32 0.0, %v580
    %v582 = vpop.f32.mrb[0].mxu0
    %583 = vmatprep.mubr.f32.mxu0 0.0
    %584 = vmatmul.mubr.f32.gmra.mrb[0].mxu0 %v176
    %v585 = vpop.f32.mrb[0].mxu0
    %v586 = vadd.f32 0.0, %v585
    %v587 = vpop.f32.mrb[0].mxu0
    %588 = vmatprep.mubr.f32.mxu0 0.0
    %589 = vmatmul.mubr.f32.gmra.mrb[0].mxu0 %v179
    %v590 = vpop.f32.mrb[0].mxu0
    %v591 = vadd.f32 0.0, %v590
    %v592 = vpop.f32.mrb[0].mxu0
    %593 = vmatprep.mubr.f32.mxu0 0.0
    %594 = vmatmul.mubr.f32.gmra.mrb[0].mxu0 %v182
    %v595 = vpop.f32.mrb[0].mxu0
    %v596 = vadd.f32 0.0, %v595
    %v597 = vpop.f32.mrb[0].mxu0
    %598 = vmatprep.mubr.f32.mxu0 0.0
    %599 = vmatmul.mubr.f32.gmra.mrb[0].mxu0 %v185
    %v600 = vpop.f32.mrb[0].mxu0
    %v601 = vadd.f32 0.0, %v600
    %v602 = vpop.f32.mrb[0].mxu0
    %603 = vmatprep.mubr.f32.mxu0 0.0
    %604 = vmatmul.mubr.f32.gmra.mrb[0].mxu0 %v188
    %v605 = vpop.f32.mrb[0].mxu0
    %v606 = vadd.f32 0.0, %v605
    %v607 = vpop.f32.mrb[0].mxu0
    %608 = vmatprep.mubr.f32.mxu0 0.0
    %609 = vmatmul.mubr.f32.gmra.mrb[0].mxu0 %v191
    %v610 = vpop.f32.mrb[0].mxu0
    %v611 = vadd.f32 0.0, %v610
    %v612 = vpop.f32.mrb[0].mxu0
    %613 = vmatprep.mubr.f32.mxu0 0.0
    %614 = vmatmul.mubr.f32.gmra.mrb[0].mxu0 %v194
    %v615 = vpop.f32.mrb[0].mxu0
    %v616 = vadd.f32 0.0, %v615
    %v617 = vpop.f32.mrb[0].mxu0
    %618 = vmatprep.mubr.f32.mxu0 0.0
    %619 = vmatmul.mubr.f32.gmra.mrb[0].mxu0 %v197
    %v620 = vpop.f32.mrb[0].mxu0
    %v621 = vadd.f32 0.0, %v620
    %v622 = vpop.f32.mrb[0].mxu0
    %623 = vmatprep.mubr.f32.mxu0 0.0
    %624 = vmatmul.mubr.f32.gmra.mrb[0].mxu0 %v200
    %v625 = vpop.f32.mrb[0].mxu0
    %v626 = vadd.f32 0.0, %v625
    %v627 = vpop.f32.mrb[0].mxu0
    %628 = vmatprep.mubr.f32.mxu0 0.0
    %629 = vmatmul.mubr.f32.gmra.mrb[0].mxu0 %v203
    %v630 = vpop.f32.mrb[0].mxu0
    %v631 = vadd.f32 0.0, %v630
    %v632 = vpop.f32.mrb[0].mxu0
    %633 = vmatprep.mubr.f32.mxu0 0.0
    %634 = vmatmul.mubr.f32.gmra.mrb[0].mxu0 %v206
    %v635 = vpop.f32.mrb[0].mxu0
    %v636 = vadd.f32 0.0, %v635
    %v637 = vpop.f32.mrb[0].mxu0
    %638 = vmatprep.mubr.f32.mxu0 0.0
    %639 = vmatmul.mubr.f32.gmra.mrb[0].mxu0 %v209
    %v640 = vpop.f32.mrb[0].mxu0
    %v641 = vadd.f32 0.0, %v640
    %v642 = vpop.f32.mrb[0].mxu0
    %643 = vmatprep.mubr.f32.mxu0 0.0
    %644 = vmatmul.mubr.f32.gmra.mrb[0].mxu0 %v212
    %v645 = vpop.f32.mrb[0].mxu0
    %v646 = vadd.f32 0.0, %v645
    %v647 = vpop.f32.mrb[0].mxu0
    %648 = vmatprep.mubr.f32.mxu0 0.0
    %649 = vmatmul.mubr.f32.gmra.mrb[0].mxu0 %v215
    %v650 = vpop.f32.mrb[0].mxu0
    %v651 = vadd.f32 0.0, %v650
    %v652 = vpop.f32.mrb[0].mxu0
    %653 = vmatprep.mubr.f32.mxu0 0.0
    %654 = vmatmul.mubr.f32.gmra.mrb[0].mxu0 %v218
    %v655 = vpop.f32.mrb[0].mxu0
    %v656 = vadd.f32 0.0, %v655
    %v657 = vpop.f32.mrb[0].mxu0
    %658 = vmatprep.mubr.f32.mxu0 0.0
    %659 = vmatmul.mubr.f32.gmra.mrb[0].mxu0 %v221
    %v660 = vpop.f32.mrb[0].mxu0
    %v661 = vadd.f32 0.0, %v660
    %v662 = vpop.f32.mrb[0].mxu0
    %663 = vmatprep.mubr.f32.mxu0 0.0
    %664 = vmatmul.mubr.f32.gmra.mrb[0].mxu0 %v224
    %v665 = vpop.f32.mrb[0].mxu0
    %v666 = vadd.f32 0.0, %v665
    %v667 = vpop.f32.mrb[0].mxu0
    %668 = vmatprep.mubr.f32.mxu0 0.0
    %669 = vmatmul.mubr.f32.gmra.mrb[0].mxu0 %v227
    %v670 = vpop.f32.mrb[0].mxu0
    %v671 = vadd.f32 0.0, %v670
    %v672 = vpop.f32.mrb[0].mxu0
    %673 = vmatprep.mubr.f32.mxu0 0.0
    %674 = vmatmul.mubr.f32.gmra.mrb[0].mxu0 %v230
    %v675 = vpop.f32.mrb[0].mxu0
    %v676 = vadd.f32 0.0, %v675
    %v677 = vpop.f32.mrb[0].mxu0
    %678 = vmatprep.mubr.f32.mxu0 0.0
    %679 = vmatmul.mubr.f32.gmra.mrb[0].mxu0 %v233
    %v680 = vpop.f32.mrb[0].mxu0
    %v681 = vadd.f32 0.0, %v680
    %v682 = vpop.f32.mrb[0].mxu0
    %683 = vmatprep.mubr.f32.mxu0 0.0
    %684 = vmatmul.mubr.f32.gmra.mrb[0].mxu0 %v236
    %v685 = vpop.f32.mrb[0].mxu0
    %v686 = vadd.f32 0.0, %v685
    %v687 = vpop.f32.mrb[0].mxu0
    %688 = vmatprep.mubr.f32.mxu0 0.0
    %689 = vmatmul.mubr.f32.gmra.mrb[0].mxu0 %v239
    %v690 = vpop.f32.mrb[0].mxu0
    %v691 = vadd.f32 0.0, %v690
    %v692 = vpop.f32.mrb[0].mxu0
    %693 = vmatprep.mubr.f32.mxu0 0.0
    %694 = vmatmul.mubr.f32.gmra.mrb[0].mxu0 %v242
    %v695 = vpop.f32.mrb[0].mxu0
    %v696 = vadd.f32 0.0, %v695
    %v697 = vpop.f32.mrb[0].mxu0
    %698 = vmatprep.mubr.f32.mxu0 0.0
    %699 = vmatmul.mubr.f32.gmra.mrb[0].mxu0 %v245
    %v700 = vpop.f32.mrb[0].mxu0
    %v701 = vadd.f32 0.0, %v700
    %v702 = vpop.f32.mrb[0].mxu0
    %703 = vmatprep.mubr.f32.mxu0 0.0
    %704 = vmatmul.mubr.f32.gmra.mrb[0].mxu0 %v248
    %v705 = vpop.f32.mrb[0].mxu0
    %v706 = vadd.f32 0.0, %v705
    %v707 = vpop.f32.mrb[0].mxu0
    %708 = vmatprep.mubr.f32.mxu0 0.0
    %709 = vmatmul.mubr.f32.gmra.mrb[0].mxu0 %v251
    %v710 = vpop.f32.mrb[0].mxu0
    %v711 = vadd.f32 0.0, %v710
    %v712 = vpop.f32.mrb[0].mxu0
    %713 = vmatprep.mubr.f32.mxu0 0.0
    %714 = vmatmul.mubr.f32.gmra.mrb[0].mxu0 %v254
    %v715 = vpop.f32.mrb[0].mxu0
    %v716 = vadd.f32 0.0, %v715
    %v717 = vpop.f32.mrb[0].mxu0
    %718 = vmatprep.mubr.f32.mxu0 0.0
    %719 = vmatmul.mubr.f32.gmra.mrb[0].mxu0 %v257
    %v720 = vpop.f32.mrb[0].mxu0
    %v721 = vadd.f32 0.0, %v720
    %v722 = vpop.f32.mrb[0].mxu0
    %723 = vmatprep.mubr.f32.mxu0 0.0
    %724 = vmatmul.mubr.f32.gmra.mrb[0].mxu0 %v260
    %v725 = vpop.f32.mrb[0].mxu0
    %v726 = vadd.f32 0.0, %v725
    %v727 = vpop.f32.mrb[0].mxu0
    %728 = vmatprep.mubr.f32.mxu0 0.0
    %729 = vmatmul.mubr.f32.gmra.mrb[0].mxu0 %v263
    %v730 = vpop.f32.mrb[0].mxu0
    %v731 = vadd.f32 0.0, %v730
    %v732 = vpop.f32.mrb[0].mxu0
    %733 = vmatprep.mubr.f32.mxu0 0.0
    %734 = vmatmul.mubr.f32.gmra.mrb[0].mxu0 %v266
    %v735 = vpop.f32.mrb[0].mxu0
    %v736 = vadd.f32 0.0, %v735
    %v737 = vpop.f32.mrb[0].mxu0
    %738 = vmatprep.mubr.f32.mxu0 0.0
    %739 = vmatmul.mubr.f32.gmra.mrb[0].mxu0 %v269
    %v740 = vpop.f32.mrb[0].mxu0
    %v741 = vadd.f32 0.0, %v740
    %v742 = vpop.f32.mrb[0].mxu0
    %743 = vmatprep.mubr.f32.mxu0 0.0
    %744 = vmatmul.mubr.f32.gmra.mrb[0].mxu0 %v272
    %v745 = vpop.f32.mrb[0].mxu0
    %v746 = vadd.f32 0.0, %v745
    %v747 = vpop.f32.mrb[0].mxu0
    %748 = vmatprep.mubr.f32.mxu0 0.0
    %749 = vmatmul.mubr.f32.gmra.mrb[0].mxu0 %v275
    %v750 = vpop.f32.mrb[0].mxu0
    %v751 = vadd.f32 0.0, %v750
    %v752 = vpop.f32.mrb[0].mxu0
    %753 = vmatprep.mubr.f32.mxu0 0.0
    %754 = vmatmul.mubr.f32.gmra.mrb[0].mxu0 %v278
    %v755 = vpop.f32.mrb[0].mxu0
    %v756 = vadd.f32 0.0, %v755
    %v757 = vpop.f32.mrb[0].mxu0
    %758 = vmatprep.mubr.f32.mxu0 0.0
    %759 = vmatmul.mubr.f32.gmra.mrb[0].mxu0 %v281
    %v760 = vpop.f32.mrb[0].mxu0
    %v761 = vadd.f32 0.0, %v760
    %v762 = vpop.f32.mrb[0].mxu0
    %763 = vmatprep.mubr.f32.mxu0 0.0
    %764 = vmatmul.mubr.f32.gmra.mrb[0].mxu0 %v284
    %v765 = vpop.f32.mrb[0].mxu0
    %v766 = vadd.f32 0.0, %v765
    %v767 = vpop.f32.mrb[0].mxu0
    %768 = vmatprep.mubr.f32.mxu0 0.0
    %769 = vmatmul.mubr.f32.gmra.mrb[0].mxu0 %v287
    %v770 = vpop.f32.mrb[0].mxu0
    %v771 = vadd.f32 0.0, %v770
    %v772 = vpop.f32.mrb[0].mxu0
    %773 = vmatprep.mubr.f32.mxu0 0.0
    %774 = vmatmul.mubr.f32.gmra.mrb[0].mxu0 %v290
    %v775 = vpop.f32.mrb[0].mxu0
    %v776 = vadd.f32 0.0, %v775
    %v777 = vpop.f32.mrb[0].mxu0
    %778 = vmatprep.mubr.f32.mxu0 0.0
    %779 = vmatmul.mubr.f32.gmra.mrb[0].mxu0 %v293
    %v780 = vpop.f32.mrb[0].mxu0
    %v781 = vadd.f32 0.0, %v780
    %v782 = vpop.f32.mrb[0].mxu0
    %783 = vmatprep.mubr.f32.mxu0 0.0
    %784 = vmatmul.mubr.f32.gmra.mrb[0].mxu0 %v296
    %v785 = vpop.f32.mrb[0].mxu0
    %v786 = vadd.f32 0.0, %v785
    %v787 = vpop.f32.mrb[0].mxu0
    %788 = vmatprep.mubr.f32.mxu0 0.0
    %789 = vmatmul.mubr.f32.gmra.mrb[0].mxu0 %v299
    %v790 = vpop.f32.mrb[0].mxu0
    %v791 = vadd.f32 0.0, %v790
    %v792 = vpop.f32.mrb[0].mxu0
    %793 = vmatprep.mubr.f32.mxu0 0.0
    %794 = vmatmul.mubr.f32.gmra.mrb[0].mxu0 %v302
    %v795 = vpop.f32.mrb[0].mxu0
    %v796 = vadd.f32 0.0, %v795
    %v797 = vpop.f32.mrb[0].mxu0
    %798 = vmatprep.mubr.f32.mxu0 0.0
    %799 = vmatmul.mubr.f32.gmra.mrb[0].mxu0 %v305
    %v800 = vpop.f32.mrb[0].mxu0
    %v801 = vadd.f32 0.0, %v800
    %v802 = vpop.f32.mrb[0].mxu0
    %803 = vmatprep.mubr.f32.mxu0 0.0
    %804 = vmatmul.mubr.f32.gmra.mrb[0].mxu0 %v308
    %v805 = vpop.f32.mrb[0].mxu0
    %v806 = vadd.f32 0.0, %v805
    %v807 = vpop.f32.mrb[0].mxu0
    %808 = vmatprep.mubr.f32.mxu0 0.0
    %809 = vmatmul.mubr.f32.gmra.mrb[0].mxu0 %v311
    %v810 = vpop.f32.mrb[0].mxu0
    %v811 = vadd.f32 0.0, %v810
    %v812 = vpop.f32.mrb[0].mxu0
    %813 = vmatprep.mubr.f32.mxu0 0.0
    %814 = vmatmul.mubr.f32.gmra.mrb[0].mxu0 %v314
    %v815 = vpop.f32.mrb[0].mxu0
    %v816 = vadd.f32 0.0, %v815
    %v817 = vpop.f32.mrb[0].mxu0
    %818 = vmatprep.mubr.f32.mxu0 0.0
    %819 = vmatmul.mubr.f32.gmra.mrb[0].mxu0 %v317
    %v820 = vpop.f32.mrb[0].mxu0
    %v821 = vadd.f32 0.0, %v820
    %v822 = vpop.f32.mrb[0].mxu0
    %823 = vmatprep.mubr.f32.mxu0 0.0
    %824 = vmatmul.mubr.f32.gmra.mrb[0].mxu0 %v320
    %v825 = vpop.f32.mrb[0].mxu0
    %v826 = vadd.f32 0.0, %v825
    %v827 = vpop.f32.mrb[0].mxu0
    %828 = vmatprep.mubr.f32.mxu0 0.0
    %829 = vmatmul.mubr.f32.gmra.mrb[0].mxu0 %v323
    %v830 = vpop.f32.mrb[0].mxu0
    %v831 = vadd.f32 0.0, %v830
    %v832 = vpop.f32.mrb[0].mxu0
    %833 = vmatprep.mubr.f32.mxu0 0.0
    %834 = vmatmul.mubr.f32.gmra.mrb[0].mxu0 %v326
    %v835 = vpop.f32.mrb[0].mxu0
    %v836 = vadd.f32 0.0, %v835
    %v837 = vpop.f32.mrb[0].mxu0
    %838 = vmatprep.mubr.f32.mxu0 0.0
    %839 = vmatmul.mubr.f32.gmra.mrb[0].mxu0 %v329
    %v840 = vpop.f32.mrb[0].mxu0
    %v841 = vadd.f32 0.0, %v840
    %v842 = vpop.f32.mrb[0].mxu0
    %843 = vmatprep.mubr.f32.mxu0 0.0
    %844 = vmatmul.mubr.f32.gmra.mrb[0].mxu0 %v332
    %v845 = vpop.f32.mrb[0].mxu0
    %v846 = vadd.f32 0.0, %v845
    %v847 = vpop.f32.mrb[0].mxu0
    %848 = vmatprep.mubr.f32.mxu0 0.0
    %849 = vmatmul.mubr.f32.gmra.mrb[0].mxu0 %v335
    %v850 = vpop.f32.mrb[0].mxu0
    %v851 = vadd.f32 0.0, %v850
    %v852 = vpop.f32.mrb[0].mxu0
    %853 = vmatprep.mubr.f32.mxu0 0.0
    %854 = vmatmul.mubr.f32.gmra.mrb[0].mxu0 %v338
    %v855 = vpop.f32.mrb[0].mxu0
    %v856 = vadd.f32 0.0, %v855
    %v857 = vpop.f32.mrb[0].mxu0
    %858 = vmatprep.mubr.f32.mxu0 0.0
    %859 = vmatmul.mubr.f32.gmra.mrb[0].mxu0 %v341
    %v860 = vpop.f32.mrb[0].mxu0
    %v861 = vadd.f32 0.0, %v860
    %v862 = vpop.f32.mrb[0].mxu0
    %863 = vmatprep.mubr.f32.mxu0 0.0
    %864 = vmatmul.mubr.f32.gmra.mrb[0].mxu0 %v344
    %v865 = vpop.f32.mrb[0].mxu0
    %v866 = vadd.f32 0.0, %v865
    %v867 = vpop.f32.mrb[0].mxu0
    %868 = vmatprep.mubr.f32.mxu0 0.0
    %869 = vmatmul.mubr.f32.gmra.mrb[0].mxu0 %v347
    %v870 = vpop.f32.mrb[0].mxu0
    %v871 = vadd.f32 0.0, %v870
    %v872 = vpop.f32.mrb[0].mxu0
    %873 = vmatprep.mubr.f32.mxu0 0.0
    %874 = vmatmul.mubr.f32.gmra.mrb[0].mxu0 %v350
    %v875 = vpop.f32.mrb[0].mxu0
    %v876 = vadd.f32 0.0, %v875
    %v877 = vpop.f32.mrb[0].mxu0
    %878 = vmatprep.mubr.f32.mxu0 0.0
    %879 = vmatmul.mubr.f32.gmra.mrb[0].mxu0 %v353
    %v880 = vpop.f32.mrb[0].mxu0
    %v881 = vadd.f32 0.0, %v880
    %v882 = vpop.f32.mrb[0].mxu0
    %883 = vmatprep.mubr.f32.mxu0 0.0
    %884 = vmatmul.mubr.f32.gmra.mrb[0].mxu0 %v356
    %v885 = vpop.f32.mrb[0].mxu0
    %v886 = vadd.f32 0.0, %v885
    %v887 = vpop.f32.mrb[0].mxu0
    %888 = vmatprep.mubr.f32.mxu0 0.0
    %889 = vmatmul.mubr.f32.gmra.mrb[0].mxu0 %v359
    %v890 = vpop.f32.mrb[0].mxu0
    %v891 = vadd.f32 0.0, %v890
    %v892 = vpop.f32.mrb[0].mxu0
    %893 = vmatprep.mubr.f32.mxu0 0.0
    %894 = vmatmul.mubr.f32.gmra.mrb[0].mxu0 %v362
    %v895 = vpop.f32.mrb[0].mxu0
    %v896 = vadd.f32 0.0, %v895
    %v897 = vpop.f32.mrb[0].mxu0
    %898 = vmatprep.mubr.f32.mxu0 0.0
    %899 = vmatmul.mubr.f32.gmra.mrb[0].mxu0 %v365
    %v900 = vpop.f32.mrb[0].mxu0
    %v901 = vadd.f32 0.0, %v900
    %v902 = vpop.f32.mrb[0].mxu0
    %903 = vmatprep.mubr.f32.mxu0 0.0
    %904 = vmatmul.mubr.f32.gmra.mrb[0].mxu0 %v368
    %v905 = vpop.f32.mrb[0].mxu0
    %v906 = vadd.f32 0.0, %v905
    %v907 = vpop.f32.mrb[0].mxu0
    %908 = vmatprep.mubr.f32.mxu0 0.0
    %909 = vmatmul.mubr.f32.gmra.mrb[0].mxu0 %v371
    %v910 = vpop.f32.mrb[0].mxu0
    %v911 = vadd.f32 0.0, %v910
    %v912 = vpop.f32.mrb[0].mxu0
    %913 = vmatprep.mubr.f32.mxu0 0.0
    %914 = vmatmul.mubr.f32.gmra.mrb[0].mxu0 %v374
    %v915 = vpop.f32.mrb[0].mxu0
    %v916 = vadd.f32 0.0, %v915
    %v917 = vpop.f32.mrb[0].mxu0
    %918 = vmatprep.mubr.f32.mxu0 0.0
    %919 = vmatmul.mubr.f32.gmra.mrb[0].mxu0 %v377
    %v920 = vpop.f32.mrb[0].mxu0
    %v921 = vadd.f32 0.0, %v920
    %v922 = vpop.f32.mrb[0].mxu0
    %923 = vmatprep.mubr.f32.mxu0 0.0
    %924 = vmatmul.mubr.f32.gmra.mrb[0].mxu0 %v380
    %v925 = vpop.f32.mrb[0].mxu0
    %v926 = vadd.f32 0.0, %v925
    %v927 = vpop.f32.mrb[0].mxu0
    %928 = vmatprep.mubr.f32.mxu0 0.0
    %929 = vmatmul.mubr.f32.gmra.mrb[0].mxu0 %v383
    %v930 = vpop.f32.mrb[0].mxu0
    %v931 = vadd.f32 0.0, %v930
    %v932 = vpop.f32.mrb[0].mxu0
    %933 = vmatprep.mubr.f32.mxu0 0.0
    %934 = vmatmul.mubr.f32.gmra.mrb[0].mxu0 %v386
    %v935 = vpop.f32.mrb[0].mxu0
    %v936 = vadd.f32 0.0, %v935
    %v937 = vpop.f32.mrb[0].mxu0
    %938 = vmatprep.mubr.f32.mxu0 0.0
    %939 = vmatmul.mubr.f32.gmra.mrb[0].mxu0 %v389
    %v940 = vpop.f32.mrb[0].mxu0
    %v941 = vadd.f32 0.0, %v940
    %v942 = vpop.f32.mrb[0].mxu0
    %943 = vmatprep.mubr.f32.mxu0 0.0
    %944 = vmatmul.mubr.f32.gmra.mrb[0].mxu0 %v392
    %v945 = vpop.f32.mrb[0].mxu0
    %v946 = vadd.f32 0.0, %v945
    %v947 = vpop.f32.mrb[0].mxu0
    %948 = vmatprep.mubr.f32.mxu0 0.0
    %949 = vmatmul.mubr.f32.gmra.mrb[0].mxu0 %v395
    %v950 = vpop.f32.mrb[0].mxu0
    %v951 = vadd.f32 0.0, %v950
    %v952 = vpop.f32.mrb[0].mxu0
    %953 = vmatprep.mubr.f32.mxu0 0.0
    %954 = vmatmul.mubr.f32.gmra.mrb[0].mxu0 %v398
    %v955 = vpop.f32.mrb[0].mxu0
    %v956 = vadd.f32 0.0, %v955
    %v957 = vpop.f32.mrb[0].mxu0
    %958 = vmatprep.mubr.f32.mxu0 0.0
    %959 = vmatmul.mubr.f32.gmra.mrb[0].mxu0 %v401
    %v960 = vpop.f32.mrb[0].mxu0
    %v961 = vadd.f32 0.0, %v960
    %v962 = vpop.f32.mrb[0].mxu0
    %963 = vmatprep.mubr.f32.mxu0 0.0
    %964 = vmatmul.mubr.f32.gmra.mrb[0].mxu0 %v404
    %v965 = vpop.f32.mrb[0].mxu0
    %v966 = vadd.f32 0.0, %v965
    %v967 = vpop.f32.mrb[0].mxu0
    %968 = vmatprep.mubr.f32.mxu0 0.0
    %969 = vmatmul.mubr.f32.gmra.mrb[0].mxu0 %v407
    %v970 = vpop.f32.mrb[0].mxu0
    %v971 = vadd.f32 0.0, %v970
    %v972 = vpop.f32.mrb[0].mxu0
    %973 = vmatprep.mubr.f32.mxu0 0.0
    %974 = vmatmul.mubr.f32.gmra.mrb[0].mxu0 %v410
    %v975 = vpop.f32.mrb[0].mxu0
    %v976 = vadd.f32 0.0, %v975
    %v977 = vpop.f32.mrb[0].mxu0
    %978 = vmatprep.mubr.f32.mxu0 0.0
    %979 = vmatmul.mubr.f32.gmra.mrb[0].mxu0 %v413
    %v980 = vpop.f32.mrb[0].mxu0
    %v981 = vadd.f32 0.0, %v980
    %v982 = vpop.f32.mrb[0].mxu0
    %983 = vmatprep.mubr.f32.mxu0 0.0
    %984 = vmatmul.mubr.f32.gmra.mrb[0].mxu0 %v416
    %v985 = vpop.f32.mrb[0].mxu0
    %v986 = vadd.f32 0.0, %v985
    %v987 = vpop.f32.mrb[0].mxu0
    %988 = vmatprep.mubr.f32.mxu0 0.0
    %989 = vmatmul.mubr.f32.gmra.mrb[0].mxu0 %v419
    %v990 = vpop.f32.mrb[0].mxu0
    %v991 = vadd.f32 0.0, %v990
    %v992 = vpop.f32.mrb[0].mxu0
    %993 = vmatprep.mubr.f32.mxu0 0.0
    %994 = vmatmul.mubr.f32.gmra.mrb[0].mxu0 %v422
    %v995 = vpop.f32.mrb[0].mxu0
    %v996 = vadd.f32 0.0, %v995
    %v997 = vpop.f32.mrb[0].mxu0
    %998 = vmatprep.mubr.f32.mxu0 0.0
    %999 = vmatmul.mubr.f32.gmra.mrb[0].mxu0 %v425
    %v1000 = vpop.f32.mrb[0].mxu0
    %v1001 = vadd.f32 0.0, %v1000
    %v1002 = vpop.f32.mrb[0].mxu0
    %1003 = vmatprep.mubr.f32.mxu0 0.0
    %1004 = vmatmul.mubr.f32.gmra.mrb[0].mxu0 %v428
    %v1005 = vpop.f32.mrb[0].mxu0
    %v1006 = vadd.f32 0.0, %v1005
    %v1007 = vpop.f32.mrb[0].mxu0
    %1008 = vmatprep.mubr.f32.mxu0 0.0
    %1009 = vmatmul.mubr.f32.gmra.mrb[0].mxu0 %v431
    %v1010 = vpop.f32.mrb[0].mxu0
    %v1011 = vadd.f32 0.0, %v1010
    %v1012 = vpop.f32.mrb[0].mxu0
    %1013 = vmatprep.mubr.f32.mxu0 0.0
    %1014 = vmatmul.mubr.f32.gmra.mrb[0].mxu0 %v434
    %v1015 = vpop.f32.mrb[0].mxu0
    %v1016 = vadd.f32 0.0, %v1015
    %v1017 = vpop.f32.mrb[0].mxu0
    %1018 = vmatprep.mubr.f32.mxu0 0.0
    %1019 = vmatmul.mubr.f32.gmra.mrb[0].mxu0 %v437
    %v1020 = vpop.f32.mrb[0].mxu0
    %v1021 = vadd.f32 0.0, %v1020
    %v1022 = vpop.f32.mrb[0].mxu0
    %1023 = vmatprep.mubr.f32.mxu0 0.0
    %1024 = vmatmul.mubr.f32.gmra.mrb[0].mxu0 %v440
    %v1025 = vpop.f32.mrb[0].mxu0
    %v1026 = vadd.f32 0.0, %v1025
    %v1027 = vpop.f32.mrb[0].mxu0
    %1028 = vmatprep.mubr.f32.mxu0 0.0
    %1029 = vmatmul.mubr.f32.gmra.mrb[0].mxu0 %v443
    %v1030 = vpop.f32.mrb[0].mxu0
    %v1031 = vadd.f32 0.0, %v1030
    %v1032 = vpop.f32.mrb[0].mxu0
    %1033 = vmatprep.mubr.f32.mxu0 0.0
    %1034 = vmatmul.mubr.f32.gmra.mrb[0].mxu0 %v446
    %v1035 = vpop.f32.mrb[0].mxu0
    %v1036 = vadd.f32 0.0, %v1035
    %v1037 = vpop.f32.mrb[0].mxu0
    %1038 = vmatprep.mubr.f32.mxu0 0.0
    %1039 = vmatmul.mubr.f32.gmra.mrb[0].mxu0 %v449
    %v1040 = vpop.f32.mrb[0].mxu0
    %v1041 = vadd.f32 0.0, %v1040
    %v1042 = vpop.f32.mrb[0].mxu0
    %1043 = vdwg.mxu0
    %v1044 = vld [vmem:[%s2] sm:$0xff]
    %v1045 = vld [vmem:[%s2 + $0x8] sm:$0xff]
    %v1046 = vld [vmem:[%s2 + $0x10] sm:$0xff]
    %v1047 = vld [vmem:[%s2 + $0x18] sm:$0xff]
    %v1048 = vld [vmem:[%s2 + $0x20] sm:$0xff]
    %v1049 = vld [vmem:[%s2 + $0x28] sm:$0xff]
    %v1050 = vld [vmem:[%s2 + $0x30] sm:$0xff]
    %v1051 = vld [vmem:[%s2 + $0x38] sm:$0xff]
    %v1052 = vld [vmem:[%s2 + $0x40] sm:$0xff]
    %v1053 = vld [vmem:[%s2 + $0x48] sm:$0xff]
    %v1054 = vld [vmem:[%s2 + $0x50] sm:$0xff]
    %v1055 = vld [vmem:[%s2 + $0x58] sm:$0xff]
    %v1056 = vld [vmem:[%s2 + $0x60] sm:$0xff]
    %v1057 = vld [vmem:[%s2 + $0x68] sm:$0xff]
    %v1058 = vld [vmem:[%s2 + $0x70] sm:$0xff]
    %v1059 = vld [vmem:[%s2 + $0x78] sm:$0xff]
    %v1060 = vmul.f32 %v566, %v726
    %v1061 = vmul.f32 %v571, %v731
    %v1062 = vmul.f32 %v576, %v736
    %v1063 = vmul.f32 %v581, %v741
    %v1064 = vmul.f32 %v586, %v746
    %v1065 = vmul.f32 %v591, %v751
    %v1066 = vmul.f32 %v596, %v756
    %v1067 = vmul.f32 %v601, %v761
    %v1068 = vmul.f32 %v606, %v766
    %v1069 = vmul.f32 %v611, %v771
    %v1070 = vmul.f32 %v616, %v776
    %v1071 = vmul.f32 %v621, %v781
    %v1072 = vmul.f32 %v626, %v786
    %v1073 = vmul.f32 %v631, %v791
    %v1074 = vmul.f32 %v636, %v796
    %v1075 = vmul.f32 %v641, %v801
    %v1076 = vmul.f32 %v646, %v806
    %v1077 = vmul.f32 %v651, %v811
    %v1078 = vmul.f32 %v656, %v816
    %v1079 = vmul.f32 %v661, %v821
    %v1080 = vmul.f32 %v666, %v826
    %v1081 = vmul.f32 %v671, %v831
    %v1082 = vmul.f32 %v676, %v836
    %v1083 = vmul.f32 %v681, %v841
    %v1084 = vmul.f32 %v686, %v846
    %v1085 = vmul.f32 %v691, %v851
    %v1086 = vmul.f32 %v696, %v856
    %v1087 = vmul.f32 %v701, %v861
    %v1088 = vmul.f32 %v706, %v866
    %v1089 = vmul.f32 %v711, %v871
    %v1090 = vmul.f32 %v716, %v876
    %v1091 = vmul.f32 %v721, %v881
    %1092 = vmatprep.subr.mxu0 0.0
    %1093 = vmatpush1.msra.mxu0 %v1060
    %1094 = vmatprep.subr.mxu0 0.0
    %1095 = vmatpush1.msra.mxu0 %v1061
    %1096 = vmatprep.subr.mxu0 0.0
    %1097 = vmatpush1.msra.mxu0 %v1062
    %1098 = vmatprep.subr.mxu0 0.0
    %1099 = vmatpush1.msra.mxu0 %v1063
    %1100 = vmatprep.subr.mxu0 0.0
    %1101 = vmatpush1.msra.mxu0 %v1064
    %1102 = vmatprep.subr.mxu0 0.0
    %1103 = vmatpush1.msra.mxu0 %v1065
    %1104 = vmatprep.subr.mxu0 0.0
    %1105 = vmatpush1.msra.mxu0 %v1066
    %1106 = vmatprep.subr.mxu0 0.0
    %1107 = vmatpush1.msra.mxu0 %v1067
    %1108 = vmatprep.subr.mxu0 0.0
    %1109 = vmatpush1.msra.mxu0 %v1068
    %1110 = vmatprep.subr.mxu0 0.0
    %1111 = vmatpush1.msra.mxu0 %v1069
    %1112 = vmatprep.subr.mxu0 0.0
    %1113 = vmatpush1.msra.mxu0 %v1070
    %1114 = vmatprep.subr.mxu0 0.0
    %1115 = vmatpush1.msra.mxu0 %v1071
    %1116 = vmatprep.subr.mxu0 0.0
    %1117 = vmatpush1.msra.mxu0 %v1072
    %1118 = vmatprep.subr.mxu0 0.0
    %1119 = vmatpush1.msra.mxu0 %v1073
    %1120 = vmatprep.subr.mxu0 0.0
    %1121 = vmatpush1.msra.mxu0 %v1074
    %1122 = vmatprep.subr.mxu0 0.0
    %1123 = vmatpush1.msra.mxu0 %v1075
    %1124 = vmatprep.subr.mxu0 0.0
    %1125 = vmatpush1.msra.mxu0 %v1076
    %1126 = vmatprep.subr.mxu0 0.0
    %1127 = vmatpush1.msra.mxu0 %v1077
    %1128 = vmatprep.subr.mxu0 0.0
    %1129 = vmatpush1.msra.mxu0 %v1078
    %1130 = vmatprep.subr.mxu0 0.0
    %1131 = vmatpush1.msra.mxu0 %v1079
    %1132 = vmatprep.subr.mxu0 0.0
    %1133 = vmatpush1.msra.mxu0 %v1080
    %1134 = vmatprep.subr.mxu0 0.0
    %1135 = vmatpush1.msra.mxu0 %v1081
    %1136 = vmatprep.subr.mxu0 0.0
    %1137 = vmatpush1.msra.mxu0 %v1082
    %1138 = vmatprep.subr.mxu0 0.0
    %1139 = vmatpush1.msra.mxu0 %v1083
    %1140 = vmatprep.subr.mxu0 0.0
    %1141 = vmatpush1.msra.mxu0 %v1084
    %1142 = vmatprep.subr.mxu0 0.0
    %1143 = vmatpush1.msra.mxu0 %v1085
    %1144 = vmatprep.subr.mxu0 0.0
    %1145 = vmatpush1.msra.mxu0 %v1086
    %1146 = vmatprep.subr.mxu0 0.0
    %1147 = vmatpush1.msra.mxu0 %v1087
    %1148 = vmatprep.subr.mxu0 0.0
    %1149 = vmatpush1.msra.mxu0 %v1088
    %1150 = vmatprep.subr.mxu0 0.0
    %1151 = vmatpush1.msra.mxu0 %v1089
    %1152 = vmatprep.subr.mxu0 0.0
    %1153 = vmatpush1.msra.mxu0 %v1090
    %1154 = vmatprep.subr.mxu0 0.0
    %1155 = vmatpush1.msra.mxu0 %v1091
    %1156 = vmatprep.mubr.f32.mxu0 %v1045
    %1157 = vmatmul.mubr.f32.gmra.mrb[0].mxu0 %v1044
    %v1158 = vpop.f32.mrb[0].mxu0
    %v1159 = vadd.f32 0.0, %v1158
    %v1160 = vpop.f32.mrb[0].mxu0
    %1161 = vmatprep.mubr.f32.mxu0 %v1047
    %1162 = vmatmul.mubr.f32.gmra.mrb[0].mxu0 %v1046
    %v1163 = vpop.f32.mrb[0].mxu0
    %v1164 = vadd.f32 0.0, %v1163
    %v1165 = vpop.f32.mrb[0].mxu0
    %1166 = vmatprep.mubr.f32.mxu0 %v1049
    %1167 = vmatmul.mubr.f32.gmra.mrb[0].mxu0 %v1048
    %v1168 = vpop.f32.mrb[0].mxu0
    %v1169 = vadd.f32 0.0, %v1168
    %v1170 = vpop.f32.mrb[0].mxu0
    %1171 = vmatprep.mubr.f32.mxu0 %v1051
    %1172 = vmatmul.mubr.f32.gmra.mrb[0].mxu0 %v1050
    %v1173 = vpop.f32.mrb[0].mxu0
    %v1174 = vadd.f32 0.0, %v1173
    %v1175 = vpop.f32.mrb[0].mxu0
    %1176 = vmatprep.mubr.f32.mxu0 %v1053
    %1177 = vmatmul.mubr.f32.gmra.mrb[0].mxu0 %v1052
    %v1178 = vpop.f32.mrb[0].mxu0
    %v1179 = vadd.f32 0.0, %v1178
    %v1180 = vpop.f32.mrb[0].mxu0
    %1181 = vmatprep.mubr.f32.mxu0 %v1055
    %1182 = vmatmul.mubr.f32.gmra.mrb[0].mxu0 %v1054
    %v1183 = vpop.f32.mrb[0].mxu0
    %v1184 = vadd.f32 0.0, %v1183
    %v1185 = vpop.f32.mrb[0].mxu0
    %1186 = vmatprep.mubr.f32.mxu0 %v1057
    %1187 = vmatmul.mubr.f32.gmra.mrb[0].mxu0 %v1056
    %v1188 = vpop.f32.mrb[0].mxu0
    %v1189 = vadd.f32 0.0, %v1188
    %v1190 = vpop.f32.mrb[0].mxu0
    %1191 = vmatprep.mubr.f32.mxu0 %v1059
    %1192 = vmatmul.mubr.f32.gmra.mrb[0].mxu0 %v1058
    %v1193 = vpop.f32.mrb[0].mxu0
    %v1194 = vadd.f32 0.0, %v1193
    %v1195 = vpop.f32.mrb[0].mxu0
    %1196 = vdwg.mxu0
    %v1197 = vmax.f32 %v1159, %v1179
    %v1198 = vmax.f32 %v1164, %v1184
    %v1199 = vmax.f32 %v1169, %v1189
    %v1200 = vmax.f32 %v1174, %v1194
    %v1201 = vmax.f32 %v1197, %v1198
    %v1202 = vmax.f32 %v1199, %v1200
    %v1203 = vmax.f32 %v1201, %v1202
    %v1204 = vsub.f32 %v1159, %v1203
    %v1205 = vsub.f32 %v1164, %v1203
    %v1206 = vsub.f32 %v1169, %v1203
    %v1207 = vsub.f32 %v1174, %v1203
    %v1208 = vsub.f32 %v1179, %v1203
    %v1209 = vsub.f32 %v1184, %v1203
    %v1210 = vsub.f32 %v1189, %v1203
    %v1211 = vsub.f32 %v1194, %v1203
    %v1212 = vmul.f32 %v1204, 1.442695
    %v1213 = vpow.pop %v1212
    %v1214 = vmul.f32 %v1205, 1.442695
    %v1215 = vpow.pop %v1214
    %v1216 = vmul.f32 %v1206, 1.442695
    %v1217 = vpow.pop %v1216
    %v1218 = vmul.f32 %v1207, 1.442695
    %v1219 = vpow.pop %v1218
    %v1220 = vmul.f32 %v1208, 1.442695
    %v1221 = vpow.pop %v1220
    %v1222 = vmul.f32 %v1209, 1.442695
    %v1223 = vpow.pop %v1222
    %v1224 = vmul.f32 %v1210, 1.442695
    %v1225 = vpow.pop %v1224
    %v1226 = vmul.f32 %v1211, 1.442695
    %v1227 = vpow.pop %v1226
    %v1228 = vadd.f32 %v1213, %v1215
    %v1229 = vadd.f32 %v1228, %v1217
    %v1230 = vadd.f32 %v1229, %v1219
    %v1231 = vadd.f32 %v1230, %v1221
    %v1232 = vadd.f32 %v1231, %v1223
    %v1233 = vadd.f32 %v1232, %v1225
    %v1234 = vadd.f32 %v1233, %v1227
    %v1235 = vrcp.pop %v1234
    %v1236 = vmul.f32 %v1213, %v1235
    %v1237 = vmul.f32 %v1215, %v1235
    %v1238 = vmul.f32 %v1217, %v1235
    %v1239 = vmul.f32 %v1219, %v1235
    %v1240 = vmul.f32 %v1221, %v1235
    %v1241 = vmul.f32 %v1223, %v1235
    %v1242 = vmul.f32 %v1225, %v1235
    %v1243 = vmul.f32 %v1227, %v1235
    %v1244 = vld [vmem:[%s3] sm:$0xff]
    %v1245 = vld [vmem:[%s3 + $0x8] sm:$0xff]
    %v1246 = vld [vmem:[%s3 + $0x10] sm:$0xff]
    %v1247 = vld [vmem:[%s3 + $0x18] sm:$0xff]
    %v1248 = vld [vmem:[%s3 + $0x20] sm:$0xff]
    %v1249 = vld [vmem:[%s3 + $0x28] sm:$0xff]
    %v1250 = vld [vmem:[%s3 + $0x30] sm:$0xff]
    %v1251 = vld [vmem:[%s3 + $0x38] sm:$0xff]
    %v1252 = vld [vmem:[%s3 + $0x40] sm:$0xff]
    %v1253 = vld [vmem:[%s3 + $0x48] sm:$0xff]
    %v1254 = vld [vmem:[%s3 + $0x50] sm:$0xff]
    %v1255 = vld [vmem:[%s3 + $0x58] sm:$0xff]
    %v1256 = vld [vmem:[%s3 + $0x60] sm:$0xff]
    %v1257 = vld [vmem:[%s3 + $0x68] sm:$0xff]
    %v1258 = vld [vmem:[%s3 + $0x70] sm:$0xff]
    %v1259 = vld [vmem:[%s3 + $0x78] sm:$0xff]
    %v1260 = vld [vmem:[%s3 + $0x80] sm:$0xff]
    %v1261 = vld [vmem:[%s3 + $0x88] sm:$0xff]
    %v1262 = vld [vmem:[%s3 + $0x90] sm:$0xff]
    %v1263 = vld [vmem:[%s3 + $0x98] sm:$0xff]
    %v1264 = vld [vmem:[%s3 + $0xa0] sm:$0xff]
    %v1265 = vld [vmem:[%s3 + $0xa8] sm:$0xff]
    %v1266 = vld [vmem:[%s3 + $0xb0] sm:$0xff]
    %v1267 = vld [vmem:[%s3 + $0xb8] sm:$0xff]
    %v1268 = vld [vmem:[%s3 + $0xc0] sm:$0xff]
    %v1269 = vld [vmem:[%s3 + $0xc8] sm:$0xff]
    %v1270 = vld [vmem:[%s3 + $0xd0] sm:$0xff]
    %v1271 = vld [vmem:[%s3 + $0xd8] sm:$0xff]
    %v1272 = vld [vmem:[%s3 + $0xe0] sm:$0xff]
    %v1273 = vld [vmem:[%s3 + $0xe8] sm:$0xff]
    %v1274 = vld [vmem:[%s3 + $0xf0] sm:$0xff]
    %v1275 = vld [vmem:[%s3 + $0xf8] sm:$0xff]
    %vm1276 = vcmask 523264
    %v1278 = vsel %vm1276, %v1244, 0
    %v1281 = vsel %vm1276, %v1245, 0
    %v1284 = vsel %vm1276, %v1246, 0
    %v1287 = vsel %vm1276, %v1247, 0
    %v1290 = vsel %vm1276, %v1248, 0
    %v1293 = vsel %vm1276, %v1249, 0
    %v1296 = vsel %vm1276, %v1250, 0
    %v1299 = vsel %vm1276, %v1251, 0
    %v1302 = vsel %vm1276, %v1252, 0
    %v1305 = vsel %vm1276, %v1253, 0
    %v1308 = vsel %vm1276, %v1254, 0
    %v1311 = vsel %vm1276, %v1255, 0
    %v1314 = vsel %vm1276, %v1256, 0
    %v1317 = vsel %vm1276, %v1257, 0
    %v1320 = vsel %vm1276, %v1258, 0
    %v1323 = vsel %vm1276, %v1259, 0
    %v1326 = vsel %vm1276, %v1260, 0
    %v1329 = vsel %vm1276, %v1261, 0
    %v1332 = vsel %vm1276, %v1262, 0
    %v1335 = vsel %vm1276, %v1263, 0
    %v1338 = vsel %vm1276, %v1264, 0
    %v1341 = vsel %vm1276, %v1265, 0
    %v1344 = vsel %vm1276, %v1266, 0
    %v1347 = vsel %vm1276, %v1267, 0
    %v1350 = vsel %vm1276, %v1268, 0
    %v1353 = vsel %vm1276, %v1269, 0
    %v1356 = vsel %vm1276, %v1270, 0
    %v1359 = vsel %vm1276, %v1271, 0
    %v1362 = vsel %vm1276, %v1272, 0
    %v1365 = vsel %vm1276, %v1273, 0
    %v1368 = vsel %vm1276, %v1274, 0
    %v1371 = vsel %vm1276, %v1275, 0
    %1373 = vmatprep.subr.mxu0 0.0
    %1374 = vmatpush1.msra.mxu0 %v1236
    %1375 = vmatprep.subr.mxu0 0.0
    %1376 = vmatpush1.msra.mxu0 %v1237
    %1377 = vmatprep.subr.mxu0 0.0
    %1378 = vmatpush1.msra.mxu0 %v1238
    %1379 = vmatprep.subr.mxu0 0.0
    %1380 = vmatpush1.msra.mxu0 %v1239
    %1381 = vmatprep.subr.mxu0 0.0
    %1382 = vmatpush1.msra.mxu0 %v1240
    %1383 = vmatprep.subr.mxu0 0.0
    %1384 = vmatpush1.msra.mxu0 %v1241
    %1385 = vmatprep.subr.mxu0 0.0
    %1386 = vmatpush1.msra.mxu0 %v1242
    %1387 = vmatprep.subr.mxu0 0.0
    %1388 = vmatpush1.msra.mxu0 %v1243
    %1389 = vmatprep.subr.mxu0 0.0
    %1390 = vmatpush1.msra.mxu0 0.0
    %1391 = vmatprep.subr.mxu0 0.0
    %1392 = vmatpush1.msra.mxu0 0.0
    %1393 = vmatprep.subr.mxu0 0.0
    %1394 = vmatpush1.msra.mxu0 0.0
    %1395 = vmatprep.subr.mxu0 0.0
    %1396 = vmatpush1.msra.mxu0 0.0
    %1397 = vmatprep.subr.mxu0 0.0
    %1398 = vmatpush1.msra.mxu0 0.0
    %1399 = vmatprep.subr.mxu0 0.0
    %1400 = vmatpush1.msra.mxu0 0.0
    %1401 = vmatprep.subr.mxu0 0.0
    %1402 = vmatpush1.msra.mxu0 0.0
    %1403 = vmatprep.subr.mxu0 0.0
    %1404 = vmatpush1.msra.mxu0 0.0
    %1405 = vmatprep.subr.mxu0 0.0
    %1406 = vmatpush1.msra.mxu0 0.0
    %1407 = vmatprep.subr.mxu0 0.0
    %1408 = vmatpush1.msra.mxu0 0.0
    %1409 = vmatprep.subr.mxu0 0.0
    %1410 = vmatpush1.msra.mxu0 0.0
    %1411 = vmatprep.subr.mxu0 0.0
    %1412 = vmatpush1.msra.mxu0 0.0
    %1413 = vmatprep.subr.mxu0 0.0
    %1414 = vmatpush1.msra.mxu0 0.0
    %1415 = vmatprep.subr.mxu0 0.0
    %1416 = vmatpush1.msra.mxu0 0.0
    %1417 = vmatprep.subr.mxu0 0.0
    %1418 = vmatpush1.msra.mxu0 0.0
    %1419 = vmatprep.subr.mxu0 0.0
    %1420 = vmatpush1.msra.mxu0 0.0
    %1421 = vmatprep.subr.mxu0 0.0
    %1422 = vmatpush1.msra.mxu0 0.0
    %1423 = vmatprep.subr.mxu0 0.0
    %1424 = vmatpush1.msra.mxu0 0.0
    %1425 = vmatprep.subr.mxu0 0.0
    %1426 = vmatpush1.msra.mxu0 0.0
    %1427 = vmatprep.subr.mxu0 0.0
    %1428 = vmatpush1.msra.mxu0 0.0
    %1429 = vmatprep.subr.mxu0 0.0
    %1430 = vmatpush1.msra.mxu0 0.0
    %1431 = vmatprep.subr.mxu0 0.0
    %1432 = vmatpush1.msra.mxu0 0.0
    %1433 = vmatprep.subr.mxu0 0.0
    %1434 = vmatpush1.msra.mxu0 0.0
    %1435 = vmatprep.subr.mxu0 0.0
    %1436 = vmatpush1.msra.mxu0 0.0
    %1437 = vmatprep.mubr.f32.mxu0 0.0
    %1438 = vmatmul.mubr.f32.gmra.mrb[0].mxu0 %v1278
    %v1439 = vpop.f32.mrb[0].mxu0
    %v1440 = vadd.f32 0.0, %v1439
    %v1441 = vpop.f32.mrb[0].mxu0
    %1442 = vmatprep.mubr.f32.mxu0 0.0
    %1443 = vmatmul.mubr.f32.gmra.mrb[0].mxu0 %v1281
    %v1444 = vpop.f32.mrb[0].mxu0
    %v1445 = vadd.f32 0.0, %v1444
    %v1446 = vpop.f32.mrb[0].mxu0
    %1447 = vmatprep.mubr.f32.mxu0 0.0
    %1448 = vmatmul.mubr.f32.gmra.mrb[0].mxu0 %v1284
    %v1449 = vpop.f32.mrb[0].mxu0
    %v1450 = vadd.f32 0.0, %v1449
    %v1451 = vpop.f32.mrb[0].mxu0
    %1452 = vmatprep.mubr.f32.mxu0 0.0
    %1453 = vmatmul.mubr.f32.gmra.mrb[0].mxu0 %v1287
    %v1454 = vpop.f32.mrb[0].mxu0
    %v1455 = vadd.f32 0.0, %v1454
    %v1456 = vpop.f32.mrb[0].mxu0
    %1457 = vmatprep.mubr.f32.mxu0 0.0
    %1458 = vmatmul.mubr.f32.gmra.mrb[0].mxu0 %v1290
    %v1459 = vpop.f32.mrb[0].mxu0
    %v1460 = vadd.f32 0.0, %v1459
    %v1461 = vpop.f32.mrb[0].mxu0
    %1462 = vmatprep.mubr.f32.mxu0 0.0
    %1463 = vmatmul.mubr.f32.gmra.mrb[0].mxu0 %v1293
    %v1464 = vpop.f32.mrb[0].mxu0
    %v1465 = vadd.f32 0.0, %v1464
    %v1466 = vpop.f32.mrb[0].mxu0
    %1467 = vmatprep.mubr.f32.mxu0 0.0
    %1468 = vmatmul.mubr.f32.gmra.mrb[0].mxu0 %v1296
    %v1469 = vpop.f32.mrb[0].mxu0
    %v1470 = vadd.f32 0.0, %v1469
    %v1471 = vpop.f32.mrb[0].mxu0
    %1472 = vmatprep.mubr.f32.mxu0 0.0
    %1473 = vmatmul.mubr.f32.gmra.mrb[0].mxu0 %v1299
    %v1474 = vpop.f32.mrb[0].mxu0
    %v1475 = vadd.f32 0.0, %v1474
    %v1476 = vpop.f32.mrb[0].mxu0
    %1477 = vmatprep.mubr.f32.mxu0 0.0
    %1478 = vmatmul.mubr.f32.gmra.mrb[0].mxu0 %v1302
    %v1479 = vpop.f32.mrb[0].mxu0
    %v1480 = vadd.f32 0.0, %v1479
    %v1481 = vpop.f32.mrb[0].mxu0
    %1482 = vmatprep.mubr.f32.mxu0 0.0
    %1483 = vmatmul.mubr.f32.gmra.mrb[0].mxu0 %v1305
    %v1484 = vpop.f32.mrb[0].mxu0
    %v1485 = vadd.f32 0.0, %v1484
    %v1486 = vpop.f32.mrb[0].mxu0
    %1487 = vmatprep.mubr.f32.mxu0 0.0
    %1488 = vmatmul.mubr.f32.gmra.mrb[0].mxu0 %v1308
    %v1489 = vpop.f32.mrb[0].mxu0
    %v1490 = vadd.f32 0.0, %v1489
    %v1491 = vpop.f32.mrb[0].mxu0
    %1492 = vmatprep.mubr.f32.mxu0 0.0
    %1493 = vmatmul.mubr.f32.gmra.mrb[0].mxu0 %v1311
    %v1494 = vpop.f32.mrb[0].mxu0
    %v1495 = vadd.f32 0.0, %v1494
    %v1496 = vpop.f32.mrb[0].mxu0
    %1497 = vmatprep.mubr.f32.mxu0 0.0
    %1498 = vmatmul.mubr.f32.gmra.mrb[0].mxu0 %v1314
    %v1499 = vpop.f32.mrb[0].mxu0
    %v1500 = vadd.f32 0.0, %v1499
    %v1501 = vpop.f32.mrb[0].mxu0
    %1502 = vmatprep.mubr.f32.mxu0 0.0
    %1503 = vmatmul.mubr.f32.gmra.mrb[0].mxu0 %v1317
    %v1504 = vpop.f32.mrb[0].mxu0
    %v1505 = vadd.f32 0.0, %v1504
    %v1506 = vpop.f32.mrb[0].mxu0
    %1507 = vmatprep.mubr.f32.mxu0 0.0
    %1508 = vmatmul.mubr.f32.gmra.mrb[0].mxu0 %v1320
    %v1509 = vpop.f32.mrb[0].mxu0
    %v1510 = vadd.f32 0.0, %v1509
    %v1511 = vpop.f32.mrb[0].mxu0
    %1512 = vmatprep.mubr.f32.mxu0 0.0
    %1513 = vmatmul.mubr.f32.gmra.mrb[0].mxu0 %v1323
    %v1514 = vpop.f32.mrb[0].mxu0
    %v1515 = vadd.f32 0.0, %v1514
    %v1516 = vpop.f32.mrb[0].mxu0
    %1517 = vmatprep.mubr.f32.mxu0 0.0
    %1518 = vmatmul.mubr.f32.gmra.mrb[0].mxu0 %v1326
    %v1519 = vpop.f32.mrb[0].mxu0
    %v1520 = vadd.f32 0.0, %v1519
    %v1521 = vpop.f32.mrb[0].mxu0
    %1522 = vmatprep.mubr.f32.mxu0 0.0
    %1523 = vmatmul.mubr.f32.gmra.mrb[0].mxu0 %v1329
    %v1524 = vpop.f32.mrb[0].mxu0
    %v1525 = vadd.f32 0.0, %v1524
    %v1526 = vpop.f32.mrb[0].mxu0
    %1527 = vmatprep.mubr.f32.mxu0 0.0
    %1528 = vmatmul.mubr.f32.gmra.mrb[0].mxu0 %v1332
    %v1529 = vpop.f32.mrb[0].mxu0
    %v1530 = vadd.f32 0.0, %v1529
    %v1531 = vpop.f32.mrb[0].mxu0
    %1532 = vmatprep.mubr.f32.mxu0 0.0
    %1533 = vmatmul.mubr.f32.gmra.mrb[0].mxu0 %v1335
    %v1534 = vpop.f32.mrb[0].mxu0
    %v1535 = vadd.f32 0.0, %v1534
    %v1536 = vpop.f32.mrb[0].mxu0
    %1537 = vmatprep.mubr.f32.mxu0 0.0
    %1538 = vmatmul.mubr.f32.gmra.mrb[0].mxu0 %v1338
    %v1539 = vpop.f32.mrb[0].mxu0
    %v1540 = vadd.f32 0.0, %v1539
    %v1541 = vpop.f32.mrb[0].mxu0
    %1542 = vmatprep.mubr.f32.mxu0 0.0
    %1543 = vmatmul.mubr.f32.gmra.mrb[0].mxu0 %v1341
    %v1544 = vpop.f32.mrb[0].mxu0
    %v1545 = vadd.f32 0.0, %v1544
    %v1546 = vpop.f32.mrb[0].mxu0
    %1547 = vmatprep.mubr.f32.mxu0 0.0
    %1548 = vmatmul.mubr.f32.gmra.mrb[0].mxu0 %v1344
    %v1549 = vpop.f32.mrb[0].mxu0
    %v1550 = vadd.f32 0.0, %v1549
    %v1551 = vpop.f32.mrb[0].mxu0
    %1552 = vmatprep.mubr.f32.mxu0 0.0
    %1553 = vmatmul.mubr.f32.gmra.mrb[0].mxu0 %v1347
    %v1554 = vpop.f32.mrb[0].mxu0
    %v1555 = vadd.f32 0.0, %v1554
    %v1556 = vpop.f32.mrb[0].mxu0
    %1557 = vmatprep.mubr.f32.mxu0 0.0
    %1558 = vmatmul.mubr.f32.gmra.mrb[0].mxu0 %v1350
    %v1559 = vpop.f32.mrb[0].mxu0
    %v1560 = vadd.f32 0.0, %v1559
    %v1561 = vpop.f32.mrb[0].mxu0
    %1562 = vmatprep.mubr.f32.mxu0 0.0
    %1563 = vmatmul.mubr.f32.gmra.mrb[0].mxu0 %v1353
    %v1564 = vpop.f32.mrb[0].mxu0
    %v1565 = vadd.f32 0.0, %v1564
    %v1566 = vpop.f32.mrb[0].mxu0
    %1567 = vmatprep.mubr.f32.mxu0 0.0
    %1568 = vmatmul.mubr.f32.gmra.mrb[0].mxu0 %v1356
    %v1569 = vpop.f32.mrb[0].mxu0
    %v1570 = vadd.f32 0.0, %v1569
    %v1571 = vpop.f32.mrb[0].mxu0
    %1572 = vmatprep.mubr.f32.mxu0 0.0
    %1573 = vmatmul.mubr.f32.gmra.mrb[0].mxu0 %v1359
    %v1574 = vpop.f32.mrb[0].mxu0
    %v1575 = vadd.f32 0.0, %v1574
    %v1576 = vpop.f32.mrb[0].mxu0
    %1577 = vmatprep.mubr.f32.mxu0 0.0
    %1578 = vmatmul.mubr.f32.gmra.mrb[0].mxu0 %v1362
    %v1579 = vpop.f32.mrb[0].mxu0
    %v1580 = vadd.f32 0.0, %v1579
    %v1581 = vpop.f32.mrb[0].mxu0
    %1582 = vmatprep.mubr.f32.mxu0 0.0
    %1583 = vmatmul.mubr.f32.gmra.mrb[0].mxu0 %v1365
    %v1584 = vpop.f32.mrb[0].mxu0
    %v1585 = vadd.f32 0.0, %v1584
    %v1586 = vpop.f32.mrb[0].mxu0
    %1587 = vmatprep.mubr.f32.mxu0 0.0
    %1588 = vmatmul.mubr.f32.gmra.mrb[0].mxu0 %v1368
    %v1589 = vpop.f32.mrb[0].mxu0
    %v1590 = vadd.f32 0.0, %v1589
    %v1591 = vpop.f32.mrb[0].mxu0
    %1592 = vmatprep.mubr.f32.mxu0 0.0
    %1593 = vmatmul.mubr.f32.gmra.mrb[0].mxu0 %v1371
    %v1594 = vpop.f32.mrb[0].mxu0
    %v1595 = vadd.f32 0.0, %v1594
    %v1596 = vpop.f32.mrb[0].mxu0
    %1597 = vdwg.mxu0
    %v1598 = vld [vmem:[%s4] sm:$0xff]
    %v1599 = vld [vmem:[%s4 + $0x8] sm:$0xff]
    %v1600 = vld [vmem:[%s4 + $0x10] sm:$0xff]
    %v1601 = vld [vmem:[%s4 + $0x18] sm:$0xff]
    %v1602 = vld [vmem:[%s4 + $0x20] sm:$0xff]
    %v1603 = vld [vmem:[%s4 + $0x28] sm:$0xff]
    %v1604 = vld [vmem:[%s4 + $0x30] sm:$0xff]
    %v1605 = vld [vmem:[%s4 + $0x38] sm:$0xff]
    %v1606 = vld [vmem:[%s4 + $0x40] sm:$0xff]
    %v1607 = vld [vmem:[%s4 + $0x48] sm:$0xff]
    %v1608 = vld [vmem:[%s4 + $0x50] sm:$0xff]
    %v1609 = vld [vmem:[%s4 + $0x58] sm:$0xff]
    %v1610 = vld [vmem:[%s4 + $0x60] sm:$0xff]
    %v1611 = vld [vmem:[%s4 + $0x68] sm:$0xff]
    %v1612 = vld [vmem:[%s4 + $0x70] sm:$0xff]
    %v1613 = vld [vmem:[%s4 + $0x78] sm:$0xff]
    %v1614 = vld [vmem:[%s4 + $0x80] sm:$0xff]
    %v1615 = vld [vmem:[%s4 + $0x88] sm:$0xff]
    %v1616 = vld [vmem:[%s4 + $0x90] sm:$0xff]
    %v1617 = vld [vmem:[%s4 + $0x98] sm:$0xff]
    %v1618 = vld [vmem:[%s4 + $0xa0] sm:$0xff]
    %v1619 = vld [vmem:[%s4 + $0xa8] sm:$0xff]
    %v1620 = vld [vmem:[%s4 + $0xb0] sm:$0xff]
    %v1621 = vld [vmem:[%s4 + $0xb8] sm:$0xff]
    %v1622 = vld [vmem:[%s4 + $0xc0] sm:$0xff]
    %v1623 = vld [vmem:[%s4 + $0xc8] sm:$0xff]
    %v1624 = vld [vmem:[%s4 + $0xd0] sm:$0xff]
    %v1625 = vld [vmem:[%s4 + $0xd8] sm:$0xff]
    %v1626 = vld [vmem:[%s4 + $0xe0] sm:$0xff]
    %v1627 = vld [vmem:[%s4 + $0xe8] sm:$0xff]
    %v1628 = vld [vmem:[%s4 + $0xf0] sm:$0xff]
    %v1629 = vld [vmem:[%s4 + $0xf8] sm:$0xff]
    %v1630 = vld [vmem:[%s4 + $0x100] sm:$0xff]
    %v1631 = vld [vmem:[%s4 + $0x108] sm:$0xff]
    %v1632 = vld [vmem:[%s4 + $0x110] sm:$0xff]
    %v1633 = vld [vmem:[%s4 + $0x118] sm:$0xff]
    %v1634 = vld [vmem:[%s4 + $0x120] sm:$0xff]
    %v1635 = vld [vmem:[%s4 + $0x128] sm:$0xff]
    %v1636 = vld [vmem:[%s4 + $0x130] sm:$0xff]
    %v1637 = vld [vmem:[%s4 + $0x138] sm:$0xff]
    %v1638 = vld [vmem:[%s4 + $0x140] sm:$0xff]
    %v1639 = vld [vmem:[%s4 + $0x148] sm:$0xff]
    %v1640 = vld [vmem:[%s4 + $0x150] sm:$0xff]
    %v1641 = vld [vmem:[%s4 + $0x158] sm:$0xff]
    %v1642 = vld [vmem:[%s4 + $0x160] sm:$0xff]
    %v1643 = vld [vmem:[%s4 + $0x168] sm:$0xff]
    %v1644 = vld [vmem:[%s4 + $0x170] sm:$0xff]
    %v1645 = vld [vmem:[%s4 + $0x178] sm:$0xff]
    %v1646 = vld [vmem:[%s4 + $0x180] sm:$0xff]
    %v1647 = vld [vmem:[%s4 + $0x188] sm:$0xff]
    %v1648 = vld [vmem:[%s4 + $0x190] sm:$0xff]
    %v1649 = vld [vmem:[%s4 + $0x198] sm:$0xff]
    %v1650 = vld [vmem:[%s4 + $0x1a0] sm:$0xff]
    %v1651 = vld [vmem:[%s4 + $0x1a8] sm:$0xff]
    %v1652 = vld [vmem:[%s4 + $0x1b0] sm:$0xff]
    %v1653 = vld [vmem:[%s4 + $0x1b8] sm:$0xff]
    %v1654 = vld [vmem:[%s4 + $0x1c0] sm:$0xff]
    %v1655 = vld [vmem:[%s4 + $0x1c8] sm:$0xff]
    %v1656 = vld [vmem:[%s4 + $0x1d0] sm:$0xff]
    %v1657 = vld [vmem:[%s4 + $0x1d8] sm:$0xff]
    %v1658 = vld [vmem:[%s4 + $0x1e0] sm:$0xff]
    %v1659 = vld [vmem:[%s4 + $0x1e8] sm:$0xff]
    %v1660 = vld [vmem:[%s4 + $0x1f0] sm:$0xff]
    %v1661 = vld [vmem:[%s4 + $0x1f8] sm:$0xff]
    %v1662 = vmul.f32 %v1440, %v886
    %v1663 = vmul.f32 %v1445, %v891
    %v1664 = vmul.f32 %v1450, %v896
    %v1665 = vmul.f32 %v1455, %v901
    %v1666 = vmul.f32 %v1460, %v906
    %v1667 = vmul.f32 %v1465, %v911
    %v1668 = vmul.f32 %v1470, %v916
    %v1669 = vmul.f32 %v1475, %v921
    %v1670 = vmul.f32 %v1480, %v926
    %v1671 = vmul.f32 %v1485, %v931
    %v1672 = vmul.f32 %v1490, %v936
    %v1673 = vmul.f32 %v1495, %v941
    %v1674 = vmul.f32 %v1500, %v946
    %v1675 = vmul.f32 %v1505, %v951
    %v1676 = vmul.f32 %v1510, %v956
    %v1677 = vmul.f32 %v1515, %v961
    %v1678 = vmul.f32 %v1520, %v966
    %v1679 = vmul.f32 %v1525, %v971
    %v1680 = vmul.f32 %v1530, %v976
    %v1681 = vmul.f32 %v1535, %v981
    %v1682 = vmul.f32 %v1540, %v986
    %v1683 = vmul.f32 %v1545, %v991
    %v1684 = vmul.f32 %v1550, %v996
    %v1685 = vmul.f32 %v1555, %v1001
    %v1686 = vmul.f32 %v1560, %v1006
    %v1687 = vmul.f32 %v1565, %v1011
    %v1688 = vmul.f32 %v1570, %v1016
    %v1689 = vmul.f32 %v1575, %v1021
    %v1690 = vmul.f32 %v1580, %v1026
    %v1691 = vmul.f32 %v1585, %v1031
    %v1692 = vmul.f32 %v1590, %v1036
    %v1693 = vmul.f32 %v1595, %v1041
    %1694 = vmatprep.subr.mxu0 0.0
    %1695 = vmatpush1.msra.mxu0 %v1662
    %1696 = vmatprep.subr.mxu0 0.0
    %1697 = vmatpush1.msra.mxu0 %v1663
    %1698 = vmatprep.subr.mxu0 0.0
    %1699 = vmatpush1.msra.mxu0 %v1664
    %1700 = vmatprep.subr.mxu0 0.0
    %1701 = vmatpush1.msra.mxu0 %v1665
    %1702 = vmatprep.subr.mxu0 0.0
    %1703 = vmatpush1.msra.mxu0 %v1666
    %1704 = vmatprep.subr.mxu0 0.0
    %1705 = vmatpush1.msra.mxu0 %v1667
    %1706 = vmatprep.subr.mxu0 0.0
    %1707 = vmatpush1.msra.mxu0 %v1668
    %1708 = vmatprep.subr.mxu0 0.0
    %1709 = vmatpush1.msra.mxu0 %v1669
    %1710 = vmatprep.subr.mxu0 0.0
    %1711 = vmatpush1.msra.mxu0 %v1670
    %1712 = vmatprep.subr.mxu0 0.0
    %1713 = vmatpush1.msra.mxu0 %v1671
    %1714 = vmatprep.subr.mxu0 0.0
    %1715 = vmatpush1.msra.mxu0 %v1672
    %1716 = vmatprep.subr.mxu0 0.0
    %1717 = vmatpush1.msra.mxu0 %v1673
    %1718 = vmatprep.subr.mxu0 0.0
    %1719 = vmatpush1.msra.mxu0 %v1674
    %1720 = vmatprep.subr.mxu0 0.0
    %1721 = vmatpush1.msra.mxu0 %v1675
    %1722 = vmatprep.subr.mxu0 0.0
    %1723 = vmatpush1.msra.mxu0 %v1676
    %1724 = vmatprep.subr.mxu0 0.0
    %1725 = vmatpush1.msra.mxu0 %v1677
    %1726 = vmatprep.subr.mxu0 0.0
    %1727 = vmatpush1.msra.mxu0 %v1678
    %1728 = vmatprep.subr.mxu0 0.0
    %1729 = vmatpush1.msra.mxu0 %v1679
    %1730 = vmatprep.subr.mxu0 0.0
    %1731 = vmatpush1.msra.mxu0 %v1680
    %1732 = vmatprep.subr.mxu0 0.0
    %1733 = vmatpush1.msra.mxu0 %v1681
    %1734 = vmatprep.subr.mxu0 0.0
    %1735 = vmatpush1.msra.mxu0 %v1682
    %1736 = vmatprep.subr.mxu0 0.0
    %1737 = vmatpush1.msra.mxu0 %v1683
    %1738 = vmatprep.subr.mxu0 0.0
    %1739 = vmatpush1.msra.mxu0 %v1684
    %1740 = vmatprep.subr.mxu0 0.0
    %1741 = vmatpush1.msra.mxu0 %v1685
    %1742 = vmatprep.subr.mxu0 0.0
    %1743 = vmatpush1.msra.mxu0 %v1686
    %1744 = vmatprep.subr.mxu0 0.0
    %1745 = vmatpush1.msra.mxu0 %v1687
    %1746 = vmatprep.subr.mxu0 0.0
    %1747 = vmatpush1.msra.mxu0 %v1688
    %1748 = vmatprep.subr.mxu0 0.0
    %1749 = vmatpush1.msra.mxu0 %v1689
    %1750 = vmatprep.subr.mxu0 0.0
    %1751 = vmatpush1.msra.mxu0 %v1690
    %1752 = vmatprep.subr.mxu0 0.0
    %1753 = vmatpush1.msra.mxu0 %v1691
    %1754 = vmatprep.subr.mxu0 0.0
    %1755 = vmatpush1.msra.mxu0 %v1692
    %1756 = vmatprep.subr.mxu0 0.0
    %1757 = vmatpush1.msra.mxu0 %v1693
    %1758 = vmatprep.mubr.f32.mxu0 %v1599
    %1759 = vmatmul.mubr.f32.gmra.mrb[0].mxu0 %v1598
    %v1760 = vpop.f32.mrb[0].mxu0
    %v1761 = vadd.f32 0.0, %v1760
    %v1762 = vpop.f32.mrb[0].mxu0
    %1763 = vmatprep.mubr.f32.mxu0 %v1601
    %1764 = vmatmul.mubr.f32.gmra.mrb[0].mxu0 %v1600
    %v1765 = vpop.f32.mrb[0].mxu0
    %v1766 = vadd.f32 0.0, %v1765
    %v1767 = vpop.f32.mrb[0].mxu0
    %1768 = vmatprep.mubr.f32.mxu0 %v1603
    %1769 = vmatmul.mubr.f32.gmra.mrb[0].mxu0 %v1602
    %v1770 = vpop.f32.mrb[0].mxu0
    %v1771 = vadd.f32 0.0, %v1770
    %v1772 = vpop.f32.mrb[0].mxu0
    %1773 = vmatprep.mubr.f32.mxu0 %v1605
    %1774 = vmatmul.mubr.f32.gmra.mrb[0].mxu0 %v1604
    %v1775 = vpop.f32.mrb[0].mxu0
    %v1776 = vadd.f32 0.0, %v1775
    %v1777 = vpop.f32.mrb[0].mxu0
    %1778 = vmatprep.mubr.f32.mxu0 %v1607
    %1779 = vmatmul.mubr.f32.gmra.mrb[0].mxu0 %v1606
    %v1780 = vpop.f32.mrb[0].mxu0
    %v1781 = vadd.f32 0.0, %v1780
    %v1782 = vpop.f32.mrb[0].mxu0
    %1783 = vmatprep.mubr.f32.mxu0 %v1609
    %1784 = vmatmul.mubr.f32.gmra.mrb[0].mxu0 %v1608
    %v1785 = vpop.f32.mrb[0].mxu0
    %v1786 = vadd.f32 0.0, %v1785
    %v1787 = vpop.f32.mrb[0].mxu0
    %1788 = vmatprep.mubr.f32.mxu0 %v1611
    %1789 = vmatmul.mubr.f32.gmra.mrb[0].mxu0 %v1610
    %v1790 = vpop.f32.mrb[0].mxu0
    %v1791 = vadd.f32 0.0, %v1790
    %v1792 = vpop.f32.mrb[0].mxu0
    %1793 = vmatprep.mubr.f32.mxu0 %v1613
    %1794 = vmatmul.mubr.f32.gmra.mrb[0].mxu0 %v1612
    %v1795 = vpop.f32.mrb[0].mxu0
    %v1796 = vadd.f32 0.0, %v1795
    %v1797 = vpop.f32.mrb[0].mxu0
    %1798 = vmatprep.mubr.f32.mxu0 %v1615
    %1799 = vmatmul.mubr.f32.gmra.mrb[0].mxu0 %v1614
    %v1800 = vpop.f32.mrb[0].mxu0
    %v1801 = vadd.f32 0.0, %v1800
    %v1802 = vpop.f32.mrb[0].mxu0
    %1803 = vmatprep.mubr.f32.mxu0 %v1617
    %1804 = vmatmul.mubr.f32.gmra.mrb[0].mxu0 %v1616
    %v1805 = vpop.f32.mrb[0].mxu0
    %v1806 = vadd.f32 0.0, %v1805
    %v1807 = vpop.f32.mrb[0].mxu0
    %1808 = vmatprep.mubr.f32.mxu0 %v1619
    %1809 = vmatmul.mubr.f32.gmra.mrb[0].mxu0 %v1618
    %v1810 = vpop.f32.mrb[0].mxu0
    %v1811 = vadd.f32 0.0, %v1810
    %v1812 = vpop.f32.mrb[0].mxu0
    %1813 = vmatprep.mubr.f32.mxu0 %v1621
    %1814 = vmatmul.mubr.f32.gmra.mrb[0].mxu0 %v1620
    %v1815 = vpop.f32.mrb[0].mxu0
    %v1816 = vadd.f32 0.0, %v1815
    %v1817 = vpop.f32.mrb[0].mxu0
    %1818 = vmatprep.mubr.f32.mxu0 %v1623
    %1819 = vmatmul.mubr.f32.gmra.mrb[0].mxu0 %v1622
    %v1820 = vpop.f32.mrb[0].mxu0
    %v1821 = vadd.f32 0.0, %v1820
    %v1822 = vpop.f32.mrb[0].mxu0
    %1823 = vmatprep.mubr.f32.mxu0 %v1625
    %1824 = vmatmul.mubr.f32.gmra.mrb[0].mxu0 %v1624
    %v1825 = vpop.f32.mrb[0].mxu0
    %v1826 = vadd.f32 0.0, %v1825
    %v1827 = vpop.f32.mrb[0].mxu0
    %1828 = vmatprep.mubr.f32.mxu0 %v1627
    %1829 = vmatmul.mubr.f32.gmra.mrb[0].mxu0 %v1626
    %v1830 = vpop.f32.mrb[0].mxu0
    %v1831 = vadd.f32 0.0, %v1830
    %v1832 = vpop.f32.mrb[0].mxu0
    %1833 = vmatprep.mubr.f32.mxu0 %v1629
    %1834 = vmatmul.mubr.f32.gmra.mrb[0].mxu0 %v1628
    %v1835 = vpop.f32.mrb[0].mxu0
    %v1836 = vadd.f32 0.0, %v1835
    %v1837 = vpop.f32.mrb[0].mxu0
    %1838 = vmatprep.mubr.f32.mxu0 %v1631
    %1839 = vmatmul.mubr.f32.gmra.mrb[0].mxu0 %v1630
    %v1840 = vpop.f32.mrb[0].mxu0
    %v1841 = vadd.f32 0.0, %v1840
    %v1842 = vpop.f32.mrb[0].mxu0
    %1843 = vmatprep.mubr.f32.mxu0 %v1633
    %1844 = vmatmul.mubr.f32.gmra.mrb[0].mxu0 %v1632
    %v1845 = vpop.f32.mrb[0].mxu0
    %v1846 = vadd.f32 0.0, %v1845
    %v1847 = vpop.f32.mrb[0].mxu0
    %1848 = vmatprep.mubr.f32.mxu0 %v1635
    %1849 = vmatmul.mubr.f32.gmra.mrb[0].mxu0 %v1634
    %v1850 = vpop.f32.mrb[0].mxu0
    %v1851 = vadd.f32 0.0, %v1850
    %v1852 = vpop.f32.mrb[0].mxu0
    %1853 = vmatprep.mubr.f32.mxu0 %v1637
    %1854 = vmatmul.mubr.f32.gmra.mrb[0].mxu0 %v1636
    %v1855 = vpop.f32.mrb[0].mxu0
    %v1856 = vadd.f32 0.0, %v1855
    %v1857 = vpop.f32.mrb[0].mxu0
    %1858 = vmatprep.mubr.f32.mxu0 %v1639
    %1859 = vmatmul.mubr.f32.gmra.mrb[0].mxu0 %v1638
    %v1860 = vpop.f32.mrb[0].mxu0
    %v1861 = vadd.f32 0.0, %v1860
    %v1862 = vpop.f32.mrb[0].mxu0
    %1863 = vmatprep.mubr.f32.mxu0 %v1641
    %1864 = vmatmul.mubr.f32.gmra.mrb[0].mxu0 %v1640
    %v1865 = vpop.f32.mrb[0].mxu0
    %v1866 = vadd.f32 0.0, %v1865
    %v1867 = vpop.f32.mrb[0].mxu0
    %1868 = vmatprep.mubr.f32.mxu0 %v1643
    %1869 = vmatmul.mubr.f32.gmra.mrb[0].mxu0 %v1642
    %v1870 = vpop.f32.mrb[0].mxu0
    %v1871 = vadd.f32 0.0, %v1870
    %v1872 = vpop.f32.mrb[0].mxu0
    %1873 = vmatprep.mubr.f32.mxu0 %v1645
    %1874 = vmatmul.mubr.f32.gmra.mrb[0].mxu0 %v1644
    %v1875 = vpop.f32.mrb[0].mxu0
    %v1876 = vadd.f32 0.0, %v1875
    %v1877 = vpop.f32.mrb[0].mxu0
    %1878 = vmatprep.mubr.f32.mxu0 %v1647
    %1879 = vmatmul.mubr.f32.gmra.mrb[0].mxu0 %v1646
    %v1880 = vpop.f32.mrb[0].mxu0
    %v1881 = vadd.f32 0.0, %v1880
    %v1882 = vpop.f32.mrb[0].mxu0
    %1883 = vmatprep.mubr.f32.mxu0 %v1649
    %1884 = vmatmul.mubr.f32.gmra.mrb[0].mxu0 %v1648
    %v1885 = vpop.f32.mrb[0].mxu0
    %v1886 = vadd.f32 0.0, %v1885
    %v1887 = vpop.f32.mrb[0].mxu0
    %1888 = vmatprep.mubr.f32.mxu0 %v1651
    %1889 = vmatmul.mubr.f32.gmra.mrb[0].mxu0 %v1650
    %v1890 = vpop.f32.mrb[0].mxu0
    %v1891 = vadd.f32 0.0, %v1890
    %v1892 = vpop.f32.mrb[0].mxu0
    %1893 = vmatprep.mubr.f32.mxu0 %v1653
    %1894 = vmatmul.mubr.f32.gmra.mrb[0].mxu0 %v1652
    %v1895 = vpop.f32.mrb[0].mxu0
    %v1896 = vadd.f32 0.0, %v1895
    %v1897 = vpop.f32.mrb[0].mxu0
    %1898 = vmatprep.mubr.f32.mxu0 %v1655
    %1899 = vmatmul.mubr.f32.gmra.mrb[0].mxu0 %v1654
    %v1900 = vpop.f32.mrb[0].mxu0
    %v1901 = vadd.f32 0.0, %v1900
    %v1902 = vpop.f32.mrb[0].mxu0
    %1903 = vmatprep.mubr.f32.mxu0 %v1657
    %1904 = vmatmul.mubr.f32.gmra.mrb[0].mxu0 %v1656
    %v1905 = vpop.f32.mrb[0].mxu0
    %v1906 = vadd.f32 0.0, %v1905
    %v1907 = vpop.f32.mrb[0].mxu0
    %1908 = vmatprep.mubr.f32.mxu0 %v1659
    %1909 = vmatmul.mubr.f32.gmra.mrb[0].mxu0 %v1658
    %v1910 = vpop.f32.mrb[0].mxu0
    %v1911 = vadd.f32 0.0, %v1910
    %v1912 = vpop.f32.mrb[0].mxu0
    %1913 = vmatprep.mubr.f32.mxu0 %v1661
    %1914 = vmatmul.mubr.f32.gmra.mrb[0].mxu0 %v1660
    %v1915 = vpop.f32.mrb[0].mxu0
    %v1916 = vadd.f32 0.0, %v1915
    %v1917 = vpop.f32.mrb[0].mxu0
    %1918 = vdwg.mxu0
    %v1919 = vld [vmem:[%s5] sm:$0xff]
    %v1920 = vld [vmem:[%s5 + $0x8] sm:$0xff]
    %v1921 = vld [vmem:[%s5 + $0x10] sm:$0xff]
    %v1922 = vld [vmem:[%s5 + $0x18] sm:$0xff]
    %v1923 = vld [vmem:[%s5 + $0x20] sm:$0xff]
    %v1924 = vld [vmem:[%s5 + $0x28] sm:$0xff]
    %v1925 = vld [vmem:[%s5 + $0x30] sm:$0xff]
    %v1926 = vld [vmem:[%s5 + $0x38] sm:$0xff]
    %v1927 = vld [vmem:[%s5 + $0x40] sm:$0xff]
    %v1928 = vld [vmem:[%s5 + $0x48] sm:$0xff]
    %v1929 = vld [vmem:[%s5 + $0x50] sm:$0xff]
    %v1930 = vld [vmem:[%s5 + $0x58] sm:$0xff]
    %v1931 = vld [vmem:[%s5 + $0x60] sm:$0xff]
    %v1932 = vld [vmem:[%s5 + $0x68] sm:$0xff]
    %v1933 = vld [vmem:[%s5 + $0x70] sm:$0xff]
    %v1934 = vld [vmem:[%s5 + $0x78] sm:$0xff]
    %v1935 = vld [vmem:[%s5 + $0x80] sm:$0xff]
    %v1936 = vld [vmem:[%s5 + $0x88] sm:$0xff]
    %v1937 = vld [vmem:[%s5 + $0x90] sm:$0xff]
    %v1938 = vld [vmem:[%s5 + $0x98] sm:$0xff]
    %v1939 = vld [vmem:[%s5 + $0xa0] sm:$0xff]
    %v1940 = vld [vmem:[%s5 + $0xa8] sm:$0xff]
    %v1941 = vld [vmem:[%s5 + $0xb0] sm:$0xff]
    %v1942 = vld [vmem:[%s5 + $0xb8] sm:$0xff]
    %v1943 = vld [vmem:[%s5 + $0xc0] sm:$0xff]
    %v1944 = vld [vmem:[%s5 + $0xc8] sm:$0xff]
    %v1945 = vld [vmem:[%s5 + $0xd0] sm:$0xff]
    %v1946 = vld [vmem:[%s5 + $0xd8] sm:$0xff]
    %v1947 = vld [vmem:[%s5 + $0xe0] sm:$0xff]
    %v1948 = vld [vmem:[%s5 + $0xe8] sm:$0xff]
    %v1949 = vld [vmem:[%s5 + $0xf0] sm:$0xff]
    %v1950 = vld [vmem:[%s5 + $0xf8] sm:$0xff]
    %v1951 = vmul.f32 %v1761, %v1919
    %v1952 = vmul.f32 %v1766, %v1920
    %v1953 = vmul.f32 %v1771, %v1921
    %v1954 = vmul.f32 %v1776, %v1922
    %v1955 = vmul.f32 %v1781, %v1923
    %v1956 = vmul.f32 %v1786, %v1924
    %v1957 = vmul.f32 %v1791, %v1925
    %v1958 = vmul.f32 %v1796, %v1926
    %v1959 = vmul.f32 %v1801, %v1927
    %v1960 = vmul.f32 %v1806, %v1928
    %v1961 = vmul.f32 %v1811, %v1929
    %v1962 = vmul.f32 %v1816, %v1930
    %v1963 = vmul.f32 %v1821, %v1931
    %v1964 = vmul.f32 %v1826, %v1932
    %v1965 = vmul.f32 %v1831, %v1933
    %v1966 = vmul.f32 %v1836, %v1934
    %v1967 = vmul.f32 %v1841, %v1935
    %v1968 = vmul.f32 %v1846, %v1936
    %v1969 = vmul.f32 %v1851, %v1937
    %v1970 = vmul.f32 %v1856, %v1938
    %v1971 = vmul.f32 %v1861, %v1939
    %v1972 = vmul.f32 %v1866, %v1940
    %v1973 = vmul.f32 %v1871, %v1941
    %v1974 = vmul.f32 %v1876, %v1942
    %v1975 = vmul.f32 %v1881, %v1943
    %v1976 = vmul.f32 %v1886, %v1944
    %v1977 = vmul.f32 %v1891, %v1945
    %v1978 = vmul.f32 %v1896, %v1946
    %v1979 = vmul.f32 %v1901, %v1947
    %v1980 = vmul.f32 %v1906, %v1948
    %v1981 = vmul.f32 %v1911, %v1949
    %v1982 = vmul.f32 %v1916, %v1950
    %v1983 = vld [vmem:[#allocation2] sm:$0xff]
    %v1984 = vld [vmem:[#allocation2 + $0x8] sm:$0xff]
    %v1985 = vld [vmem:[#allocation2 + $0x10] sm:$0xff]
    %v1986 = vld [vmem:[#allocation2 + $0x18] sm:$0xff]
    %v1987 = vld [vmem:[#allocation2 + $0x20] sm:$0xff]
    %v1988 = vld [vmem:[#allocation2 + $0x28] sm:$0xff]
    %v1989 = vld [vmem:[#allocation2 + $0x30] sm:$0xff]
    %v1990 = vld [vmem:[#allocation2 + $0x38] sm:$0xff]
    %v1991 = vld [vmem:[#allocation2 + $0x40] sm:$0xff]
    %v1992 = vld [vmem:[#allocation2 + $0x48] sm:$0xff]
    %v1993 = vld [vmem:[#allocation2 + $0x50] sm:$0xff]
    %v1994 = vld [vmem:[#allocation2 + $0x58] sm:$0xff]
    %v1995 = vld [vmem:[#allocation2 + $0x60] sm:$0xff]
    %v1996 = vld [vmem:[#allocation2 + $0x68] sm:$0xff]
    %v1997 = vld [vmem:[#allocation2 + $0x70] sm:$0xff]
    %v1998 = vld [vmem:[#allocation2 + $0x78] sm:$0xff]
    %1999 = vmatprep.subr.mxu0 0.0
    %2000 = vmatpush1.msra.mxu0 %v1983
    %2001 = vmatprep.subr.mxu0 0.0
    %2002 = vmatpush1.msra.mxu0 %v1984
    %2003 = vmatprep.subr.mxu0 0.0
    %2004 = vmatpush1.msra.mxu0 %v1985
    %2005 = vmatprep.subr.mxu0 0.0
    %2006 = vmatpush1.msra.mxu0 %v1986
    %2007 = vmatprep.subr.mxu0 0.0
    %2008 = vmatpush1.msra.mxu0 %v1987
    %2009 = vmatprep.subr.mxu0 0.0
    %2010 = vmatpush1.msra.mxu0 %v1988
    %2011 = vmatprep.subr.mxu0 0.0
    %2012 = vmatpush1.msra.mxu0 %v1989
    %2013 = vmatprep.subr.mxu0 0.0
    %2014 = vmatpush1.msra.mxu0 %v1990
    %2015 = vmatprep.subr.mxu0 0.0
    %2016 = vmatpush1.msra.mxu0 %v1991
    %2017 = vmatprep.subr.mxu0 0.0
    %2018 = vmatpush1.msra.mxu0 %v1992
    %2019 = vmatprep.subr.mxu0 0.0
    %2020 = vmatpush1.msra.mxu0 %v1993
    %2021 = vmatprep.subr.mxu0 0.0
    %2022 = vmatpush1.msra.mxu0 %v1994
    %2023 = vmatprep.subr.mxu0 0.0
    %2024 = vmatpush1.msra.mxu0 %v1995
    %2025 = vmatprep.subr.mxu0 0.0
    %2026 = vmatpush1.msra.mxu0 %v1996
    %2027 = vmatprep.subr.mxu0 0.0
    %2028 = vmatpush1.msra.mxu0 %v1997
    %2029 = vmatprep.subr.mxu0 0.0
    %2030 = vmatpush1.msra.mxu0 %v1998
    %2031 = vmatprep.subr.mxu0 0.0
    %2032 = vmatpush1.msra.mxu0 0.0
    %2033 = vmatprep.subr.mxu0 0.0
    %2034 = vmatpush1.msra.mxu0 0.0
    %2035 = vmatprep.subr.mxu0 0.0
    %2036 = vmatpush1.msra.mxu0 0.0
    %2037 = vmatprep.subr.mxu0 0.0
    %2038 = vmatpush1.msra.mxu0 0.0
    %2039 = vmatprep.subr.mxu0 0.0
    %2040 = vmatpush1.msra.mxu0 0.0
    %2041 = vmatprep.subr.mxu0 0.0
    %2042 = vmatpush1.msra.mxu0 0.0
    %2043 = vmatprep.subr.mxu0 0.0
    %2044 = vmatpush1.msra.mxu0 0.0
    %2045 = vmatprep.subr.mxu0 0.0
    %2046 = vmatpush1.msra.mxu0 0.0
    %2047 = vmatprep.subr.mxu0 0.0
    %2048 = vmatpush1.msra.mxu0 0.0
    %2049 = vmatprep.subr.mxu0 0.0
    %2050 = vmatpush1.msra.mxu0 0.0
    %2051 = vmatprep.subr.mxu0 0.0
    %2052 = vmatpush1.msra.mxu0 0.0
    %2053 = vmatprep.subr.mxu0 0.0
    %2054 = vmatpush1.msra.mxu0 0.0
    %2055 = vmatprep.subr.mxu0 0.0
    %2056 = vmatpush1.msra.mxu0 0.0
    %2057 = vmatprep.subr.mxu0 0.0
    %2058 = vmatpush1.msra.mxu0 0.0
    %2059 = vmatprep.subr.mxu0 0.0
    %2060 = vmatpush1.msra.mxu0 0.0
    %2061 = vmatprep.subr.mxu0 0.0
    %2062 = vmatpush1.msra.mxu0 0.0
    %2063 = vmatprep.mubr.f32.mxu0 0.0
    %2064 = vmatmul.mubr.f32.gmra.mrb[0].mxu0 %v1951
    %v2065 = vpop.f32.mrb[0].mxu0
    %v2066 = vadd.f32 0.0, %v2065
    %v2067 = vpop.f32.mrb[0].mxu0
    %2068 = vmatprep.mubr.f32.mxu0 0.0
    %2069 = vmatmul.mubr.f32.gmra.mrb[0].mxu0 %v1952
    %v2070 = vpop.f32.mrb[0].mxu0
    %v2071 = vadd.f32 0.0, %v2070
    %v2072 = vpop.f32.mrb[0].mxu0
    %2073 = vmatprep.mubr.f32.mxu0 0.0
    %2074 = vmatmul.mubr.f32.gmra.mrb[0].mxu0 %v1953
    %v2075 = vpop.f32.mrb[0].mxu0
    %v2076 = vadd.f32 0.0, %v2075
    %v2077 = vpop.f32.mrb[0].mxu0
    %2078 = vmatprep.mubr.f32.mxu0 0.0
    %2079 = vmatmul.mubr.f32.gmra.mrb[0].mxu0 %v1954
    %v2080 = vpop.f32.mrb[0].mxu0
    %v2081 = vadd.f32 0.0, %v2080
    %v2082 = vpop.f32.mrb[0].mxu0
    %2083 = vmatprep.mubr.f32.mxu0 0.0
    %2084 = vmatmul.mubr.f32.gmra.mrb[0].mxu0 %v1955
    %v2085 = vpop.f32.mrb[0].mxu0
    %v2086 = vadd.f32 0.0, %v2085
    %v2087 = vpop.f32.mrb[0].mxu0
    %2088 = vmatprep.mubr.f32.mxu0 0.0
    %2089 = vmatmul.mubr.f32.gmra.mrb[0].mxu0 %v1956
    %v2090 = vpop.f32.mrb[0].mxu0
    %v2091 = vadd.f32 0.0, %v2090
    %v2092 = vpop.f32.mrb[0].mxu0
    %2093 = vmatprep.mubr.f32.mxu0 0.0
    %2094 = vmatmul.mubr.f32.gmra.mrb[0].mxu0 %v1957
    %v2095 = vpop.f32.mrb[0].mxu0
    %v2096 = vadd.f32 0.0, %v2095
    %v2097 = vpop.f32.mrb[0].mxu0
    %2098 = vmatprep.mubr.f32.mxu0 0.0
    %2099 = vmatmul.mubr.f32.gmra.mrb[0].mxu0 %v1958
    %v2100 = vpop.f32.mrb[0].mxu0
    %v2101 = vadd.f32 0.0, %v2100
    %v2102 = vpop.f32.mrb[0].mxu0
    %2103 = vmatprep.mubr.f32.mxu0 0.0
    %2104 = vmatmul.mubr.f32.gmra.mrb[0].mxu0 %v1959
    %v2105 = vpop.f32.mrb[0].mxu0
    %v2106 = vadd.f32 0.0, %v2105
    %v2107 = vpop.f32.mrb[0].mxu0
    %2108 = vmatprep.mubr.f32.mxu0 0.0
    %2109 = vmatmul.mubr.f32.gmra.mrb[0].mxu0 %v1960
    %v2110 = vpop.f32.mrb[0].mxu0
    %v2111 = vadd.f32 0.0, %v2110
    %v2112 = vpop.f32.mrb[0].mxu0
    %2113 = vmatprep.mubr.f32.mxu0 0.0
    %2114 = vmatmul.mubr.f32.gmra.mrb[0].mxu0 %v1961
    %v2115 = vpop.f32.mrb[0].mxu0
    %v2116 = vadd.f32 0.0, %v2115
    %v2117 = vpop.f32.mrb[0].mxu0
    %2118 = vmatprep.mubr.f32.mxu0 0.0
    %2119 = vmatmul.mubr.f32.gmra.mrb[0].mxu0 %v1962
    %v2120 = vpop.f32.mrb[0].mxu0
    %v2121 = vadd.f32 0.0, %v2120
    %v2122 = vpop.f32.mrb[0].mxu0
    %2123 = vmatprep.mubr.f32.mxu0 0.0
    %2124 = vmatmul.mubr.f32.gmra.mrb[0].mxu0 %v1963
    %v2125 = vpop.f32.mrb[0].mxu0
    %v2126 = vadd.f32 0.0, %v2125
    %v2127 = vpop.f32.mrb[0].mxu0
    %2128 = vmatprep.mubr.f32.mxu0 0.0
    %2129 = vmatmul.mubr.f32.gmra.mrb[0].mxu0 %v1964
    %v2130 = vpop.f32.mrb[0].mxu0
    %v2131 = vadd.f32 0.0, %v2130
    %v2132 = vpop.f32.mrb[0].mxu0
    %2133 = vmatprep.mubr.f32.mxu0 0.0
    %2134 = vmatmul.mubr.f32.gmra.mrb[0].mxu0 %v1965
    %v2135 = vpop.f32.mrb[0].mxu0
    %v2136 = vadd.f32 0.0, %v2135
    %v2137 = vpop.f32.mrb[0].mxu0
    %2138 = vmatprep.mubr.f32.mxu0 0.0
    %2139 = vmatmul.mubr.f32.gmra.mrb[0].mxu0 %v1966
    %v2140 = vpop.f32.mrb[0].mxu0
    %v2141 = vadd.f32 0.0, %v2140
    %v2142 = vpop.f32.mrb[0].mxu0
    %2143 = vmatprep.mubr.f32.mxu0 0.0
    %2144 = vmatmul.mubr.f32.gmra.mrb[0].mxu0 %v1967
    %v2145 = vpop.f32.mrb[0].mxu0
    %v2146 = vadd.f32 0.0, %v2145
    %v2147 = vpop.f32.mrb[0].mxu0
    %2148 = vmatprep.mubr.f32.mxu0 0.0
    %2149 = vmatmul.mubr.f32.gmra.mrb[0].mxu0 %v1968
    %v2150 = vpop.f32.mrb[0].mxu0
    %v2151 = vadd.f32 0.0, %v2150
    %v2152 = vpop.f32.mrb[0].mxu0
    %2153 = vmatprep.mubr.f32.mxu0 0.0
    %2154 = vmatmul.mubr.f32.gmra.mrb[0].mxu0 %v1969
    %v2155 = vpop.f32.mrb[0].mxu0
    %v2156 = vadd.f32 0.0, %v2155
    %v2157 = vpop.f32.mrb[0].mxu0
    %2158 = vmatprep.mubr.f32.mxu0 0.0
    %2159 = vmatmul.mubr.f32.gmra.mrb[0].mxu0 %v1970
    %v2160 = vpop.f32.mrb[0].mxu0
    %v2161 = vadd.f32 0.0, %v2160
    %v2162 = vpop.f32.mrb[0].mxu0
    %2163 = vmatprep.mubr.f32.mxu0 0.0
    %2164 = vmatmul.mubr.f32.gmra.mrb[0].mxu0 %v1971
    %v2165 = vpop.f32.mrb[0].mxu0
    %v2166 = vadd.f32 0.0, %v2165
    %v2167 = vpop.f32.mrb[0].mxu0
    %2168 = vmatprep.mubr.f32.mxu0 0.0
    %2169 = vmatmul.mubr.f32.gmra.mrb[0].mxu0 %v1972
    %v2170 = vpop.f32.mrb[0].mxu0
    %v2171 = vadd.f32 0.0, %v2170
    %v2172 = vpop.f32.mrb[0].mxu0
    %2173 = vmatprep.mubr.f32.mxu0 0.0
    %2174 = vmatmul.mubr.f32.gmra.mrb[0].mxu0 %v1973
    %v2175 = vpop.f32.mrb[0].mxu0
    %v2176 = vadd.f32 0.0, %v2175
    %v2177 = vpop.f32.mrb[0].mxu0
    %2178 = vmatprep.mubr.f32.mxu0 0.0
    %2179 = vmatmul.mubr.f32.gmra.mrb[0].mxu0 %v1974
    %v2180 = vpop.f32.mrb[0].mxu0
    %v2181 = vadd.f32 0.0, %v2180
    %v2182 = vpop.f32.mrb[0].mxu0
    %2183 = vmatprep.mubr.f32.mxu0 0.0
    %2184 = vmatmul.mubr.f32.gmra.mrb[0].mxu0 %v1975
    %v2185 = vpop.f32.mrb[0].mxu0
    %v2186 = vadd.f32 0.0, %v2185
    %v2187 = vpop.f32.mrb[0].mxu0
    %2188 = vmatprep.mubr.f32.mxu0 0.0
    %2189 = vmatmul.mubr.f32.gmra.mrb[0].mxu0 %v1976
    %v2190 = vpop.f32.mrb[0].mxu0
    %v2191 = vadd.f32 0.0, %v2190
    %v2192 = vpop.f32.mrb[0].mxu0
    %2193 = vmatprep.mubr.f32.mxu0 0.0
    %2194 = vmatmul.mubr.f32.gmra.mrb[0].mxu0 %v1977
    %v2195 = vpop.f32.mrb[0].mxu0
    %v2196 = vadd.f32 0.0, %v2195
    %v2197 = vpop.f32.mrb[0].mxu0
    %2198 = vmatprep.mubr.f32.mxu0 0.0
    %2199 = vmatmul.mubr.f32.gmra.mrb[0].mxu0 %v1978
    %v2200 = vpop.f32.mrb[0].mxu0
    %v2201 = vadd.f32 0.0, %v2200
    %v2202 = vpop.f32.mrb[0].mxu0
    %2203 = vmatprep.mubr.f32.mxu0 0.0
    %2204 = vmatmul.mubr.f32.gmra.mrb[0].mxu0 %v1979
    %v2205 = vpop.f32.mrb[0].mxu0
    %v2206 = vadd.f32 0.0, %v2205
    %v2207 = vpop.f32.mrb[0].mxu0
    %2208 = vmatprep.mubr.f32.mxu0 0.0
    %2209 = vmatmul.mubr.f32.gmra.mrb[0].mxu0 %v1980
    %v2210 = vpop.f32.mrb[0].mxu0
    %v2211 = vadd.f32 0.0, %v2210
    %v2212 = vpop.f32.mrb[0].mxu0
    %2213 = vmatprep.mubr.f32.mxu0 0.0
    %2214 = vmatmul.mubr.f32.gmra.mrb[0].mxu0 %v1981
    %v2215 = vpop.f32.mrb[0].mxu0
    %v2216 = vadd.f32 0.0, %v2215
    %v2217 = vpop.f32.mrb[0].mxu0
    %2218 = vmatprep.mubr.f32.mxu0 0.0
    %2219 = vmatmul.mubr.f32.gmra.mrb[0].mxu0 %v1982
    %v2220 = vpop.f32.mrb[0].mxu0
    %v2221 = vadd.f32 0.0, %v2220
    %v2222 = vpop.f32.mrb[0].mxu0
    %2223 = vdwg.mxu0
    %v2224 = vld [vmem:[%s8] sm:$0xff]
    %v2225 = vld [vmem:[%s8 + $0x8] sm:$0xff]
    %v2226 = vld [vmem:[%s8 + $0x10] sm:$0xff]
    %v2227 = vld [vmem:[%s8 + $0x18] sm:$0xff]
    %v2228 = vld [vmem:[%s8 + $0x20] sm:$0xff]
    %v2229 = vld [vmem:[%s8 + $0x28] sm:$0xff]
    %v2230 = vld [vmem:[%s8 + $0x30] sm:$0xff]
    %v2231 = vld [vmem:[%s8 + $0x38] sm:$0xff]
    %v2232 = vld [vmem:[%s7] sm:$0xff]
    %v2233 = vld [vmem:[%s7 + $0x8] sm:$0xff]
    %v2234 = vld [vmem:[%s7 + $0x10] sm:$0xff]
    %v2235 = vld [vmem:[%s7 + $0x18] sm:$0xff]
    %v2236 = vld [vmem:[%s7 + $0x20] sm:$0xff]
    %v2237 = vld [vmem:[%s7 + $0x28] sm:$0xff]
    %v2238 = vld [vmem:[%s7 + $0x30] sm:$0xff]
    %v2239 = vld [vmem:[%s7 + $0x38] sm:$0xff]
    %v2240 = vld [vmem:[%s7 + $0x40] sm:$0xff]
    %v2241 = vld [vmem:[%s7 + $0x48] sm:$0xff]
    %v2242 = vld [vmem:[%s7 + $0x50] sm:$0xff]
    %v2243 = vld [vmem:[%s7 + $0x58] sm:$0xff]
    %v2244 = vld [vmem:[%s7 + $0x60] sm:$0xff]
    %v2245 = vld [vmem:[%s7 + $0x68] sm:$0xff]
    %v2246 = vld [vmem:[%s7 + $0x70] sm:$0xff]
    %v2247 = vld [vmem:[%s7 + $0x78] sm:$0xff]
    %v2248 = vld [vmem:[%s7 + $0x80] sm:$0xff]
    %v2249 = vld [vmem:[%s7 + $0x88] sm:$0xff]
    %v2250 = vld [vmem:[%s7 + $0x90] sm:$0xff]
    %v2251 = vld [vmem:[%s7 + $0x98] sm:$0xff]
    %v2252 = vld [vmem:[%s7 + $0xa0] sm:$0xff]
    %v2253 = vld [vmem:[%s7 + $0xa8] sm:$0xff]
    %v2254 = vld [vmem:[%s7 + $0xb0] sm:$0xff]
    %v2255 = vld [vmem:[%s7 + $0xb8] sm:$0xff]
    %v2256 = vld [vmem:[%s7 + $0xc0] sm:$0xff]
    %v2257 = vld [vmem:[%s7 + $0xc8] sm:$0xff]
    %v2258 = vld [vmem:[%s7 + $0xd0] sm:$0xff]
    %v2259 = vld [vmem:[%s7 + $0xd8] sm:$0xff]
    %v2260 = vld [vmem:[%s7 + $0xe0] sm:$0xff]
    %v2261 = vld [vmem:[%s7 + $0xe8] sm:$0xff]
    %v2262 = vld [vmem:[%s7 + $0xf0] sm:$0xff]
    %v2263 = vld [vmem:[%s7 + $0xf8] sm:$0xff]
    %v2264 = vmul.f32 %v2066, %v2232
    %v2265 = vmul.f32 %v2071, %v2233
    %v2266 = vmul.f32 %v2076, %v2234
    %v2267 = vmul.f32 %v2081, %v2235
    %v2268 = vmul.f32 %v2086, %v2236
    %v2269 = vmul.f32 %v2091, %v2237
    %v2270 = vmul.f32 %v2096, %v2238
    %v2271 = vmul.f32 %v2101, %v2239
    %v2272 = vmul.f32 %v2106, %v2240
    %v2273 = vmul.f32 %v2111, %v2241
    %v2274 = vmul.f32 %v2116, %v2242
    %v2275 = vmul.f32 %v2121, %v2243
    %v2276 = vmul.f32 %v2126, %v2244
    %v2277 = vmul.f32 %v2131, %v2245
    %v2278 = vmul.f32 %v2136, %v2246
    %v2279 = vmul.f32 %v2141, %v2247
    %v2280 = vmul.f32 %v2146, %v2248
    %v2281 = vmul.f32 %v2151, %v2249
    %v2282 = vmul.f32 %v2156, %v2250
    %v2283 = vmul.f32 %v2161, %v2251
    %v2284 = vmul.f32 %v2166, %v2252
    %v2285 = vmul.f32 %v2171, %v2253
    %v2286 = vmul.f32 %v2176, %v2254
    %v2287 = vmul.f32 %v2181, %v2255
    %v2288 = vmul.f32 %v2186, %v2256
    %v2289 = vmul.f32 %v2191, %v2257
    %v2290 = vmul.f32 %v2196, %v2258
    %v2291 = vmul.f32 %v2201, %v2259
    %v2292 = vmul.f32 %v2206, %v2260
    %v2293 = vmul.f32 %v2211, %v2261
    %v2294 = vmul.f32 %v2216, %v2262
    %v2295 = vmul.f32 %v2221, %v2263
    %v2296 = vld [vmem:[%s9] sm:$0xff]
    %v2297 = vld [vmem:[%s9 + $0x8] sm:$0xff]
    %v2298 = vld [vmem:[%s9 + $0x10] sm:$0xff]
    %v2299 = vld [vmem:[%s9 + $0x18] sm:$0xff]
    %2301 = vset.pattern.permute.xlu0 0
    %2302 = vperm.xlu0 %2301, %v2296
    %v2303 = vpop.permute.xlu0 %2302
    %2306 = vset.pattern.permute.xlu0 0
    %2307 = vperm.xlu0 %2306, %v2297
    %v2308 = vpop.permute.xlu0 %2307
    %2311 = vset.pattern.permute.xlu0 0
    %2312 = vperm.xlu0 %2311, %v2298
    %v2313 = vpop.permute.xlu0 %2312
    %2316 = vset.pattern.permute.xlu0 0
    %2317 = vperm.xlu0 %2316, %v2299
    %v2318 = vpop.permute.xlu0 %2317
    %2320 = vmatprep.subr.mxu0 0.0
    %2321 = vmatpush1.msra.mxu0 %v2264
    %2322 = vmatprep.subr.mxu0 0.0
    %2323 = vmatpush1.msra.mxu0 %v2265
    %2324 = vmatprep.subr.mxu0 0.0
    %2325 = vmatpush1.msra.mxu0 %v2266
    %2326 = vmatprep.subr.mxu0 0.0
    %2327 = vmatpush1.msra.mxu0 %v2267
    %2328 = vmatprep.subr.mxu0 0.0
    %2329 = vmatpush1.msra.mxu0 %v2268
    %2330 = vmatprep.subr.mxu0 0.0
    %2331 = vmatpush1.msra.mxu0 %v2269
    %2332 = vmatprep.subr.mxu0 0.0
    %2333 = vmatpush1.msra.mxu0 %v2270
    %2334 = vmatprep.subr.mxu0 0.0
    %2335 = vmatpush1.msra.mxu0 %v2271
    %2336 = vmatprep.subr.mxu0 0.0
    %2337 = vmatpush1.msra.mxu0 %v2272
    %2338 = vmatprep.subr.mxu0 0.0
    %2339 = vmatpush1.msra.mxu0 %v2273
    %2340 = vmatprep.subr.mxu0 0.0
    %2341 = vmatpush1.msra.mxu0 %v2274
    %2342 = vmatprep.subr.mxu0 0.0
    %2343 = vmatpush1.msra.mxu0 %v2275
    %2344 = vmatprep.subr.mxu0 0.0
    %2345 = vmatpush1.msra.mxu0 %v2276
    %2346 = vmatprep.subr.mxu0 0.0
    %2347 = vmatpush1.msra.mxu0 %v2277
    %2348 = vmatprep.subr.mxu0 0.0
    %2349 = vmatpush1.msra.mxu0 %v2278
    %2350 = vmatprep.subr.mxu0 0.0
    %2351 = vmatpush1.msra.mxu0 %v2279
    %2352 = vmatprep.subr.mxu0 0.0
    %2353 = vmatpush1.msra.mxu0 %v2280
    %2354 = vmatprep.subr.mxu0 0.0
    %2355 = vmatpush1.msra.mxu0 %v2281
    %2356 = vmatprep.subr.mxu0 0.0
    %2357 = vmatpush1.msra.mxu0 %v2282
    %2358 = vmatprep.subr.mxu0 0.0
    %2359 = vmatpush1.msra.mxu0 %v2283
    %2360 = vmatprep.subr.mxu0 0.0
    %2361 = vmatpush1.msra.mxu0 %v2284
    %2362 = vmatprep.subr.mxu0 0.0
    %2363 = vmatpush1.msra.mxu0 %v2285
    %2364 = vmatprep.subr.mxu0 0.0
    %2365 = vmatpush1.msra.mxu0 %v2286
    %2366 = vmatprep.subr.mxu0 0.0
    %2367 = vmatpush1.msra.mxu0 %v2287
    %2368 = vmatprep.subr.mxu0 0.0
    %2369 = vmatpush1.msra.mxu0 %v2288
    %2370 = vmatprep.subr.mxu0 0.0
    %2371 = vmatpush1.msra.mxu0 %v2289
    %2372 = vmatprep.subr.mxu0 0.0
    %2373 = vmatpush1.msra.mxu0 %v2290
    %2374 = vmatprep.subr.mxu0 0.0
    %2375 = vmatpush1.msra.mxu0 %v2291
    %2376 = vmatprep.subr.mxu0 0.0
    %2377 = vmatpush1.msra.mxu0 %v2292
    %2378 = vmatprep.subr.mxu0 0.0
    %2379 = vmatpush1.msra.mxu0 %v2293
    %2380 = vmatprep.subr.mxu0 0.0
    %2381 = vmatpush1.msra.mxu0 %v2294
    %2382 = vmatprep.subr.mxu0 0.0
    %2383 = vmatpush1.msra.mxu0 %v2295
    %2384 = vmatprep.mubr.f32.mxu0 %v2225
    %2385 = vmatmul.mubr.f32.gmra.mrb[0].mxu0 %v2224
    %v2386 = vpop.f32.mrb[0].mxu0
    %v2387 = vadd.f32 %v2303, %v2386
    %v2388 = vpop.f32.mrb[0].mxu0
    %2389 = vmatprep.mubr.f32.mxu0 %v2227
    %2390 = vmatmul.mubr.f32.gmra.mrb[0].mxu0 %v2226
    %v2391 = vpop.f32.mrb[0].mxu0
    %v2392 = vadd.f32 %v2308, %v2391
    %v2393 = vpop.f32.mrb[0].mxu0
    %2394 = vmatprep.mubr.f32.mxu0 %v2229
    %2395 = vmatmul.mubr.f32.gmra.mrb[0].mxu0 %v2228
    %v2396 = vpop.f32.mrb[0].mxu0
    %v2397 = vadd.f32 %v2313, %v2396
    %v2398 = vpop.f32.mrb[0].mxu0
    %2399 = vmatprep.mubr.f32.mxu0 %v2231
    %2400 = vmatmul.mubr.f32.gmra.mrb[0].mxu0 %v2230
    %v2401 = vpop.f32.mrb[0].mxu0
    %v2402 = vadd.f32 %v2318, %v2401
    %v2403 = vpop.f32.mrb[0].mxu0
    %2404 = vdwg.mxu0
    %2405 = vst [vmem:[#allocation5] sm:$0xff] %v2387
    %2406 = vst [vmem:[#allocation5 + $0x8] sm:$0xff] %v2392
    %2407 = vst [vmem:[#allocation5 + $0x10] sm:$0xff] %v2397
    %2408 = vst [vmem:[#allocation5 + $0x18] sm:$0xff] %v2402
    // Predicated region
    $region46: #{tpu_custom_call.1} parent=1 // pred_check
      _
    $region47: #{tpu_custom_call.1} parent=1 // pred_check_branch
      %2410 = sbr.rel (0) target = $region49
    $region48: #{tpu_custom_call.1} parent=1 // pred_region
      %s2412 = ssub.s32 512, 512
      %2413 = vsyncadd [#allocation4], %s2412
      %s2414 = sshll.u32 [#allocation5], 4
      %s2415 = int_to_ptr.vmem [resolvable:$true] %s2414
      %2420 = dma.vmem_to_hbm [thread:$0]  %s2415, 512, %s10, [#allocation4], 128, 128, 8
    $region49: #{tpu_custom_call.1} parent=1 // pred_fallthru
      _
    // Predicated region
    $region50: #{tpu_custom_call.1} parent=1 // pred_check
      _
    $region51: #{tpu_custom_call.1} parent=1 // pred_check_branch
      %2422 = sbr.rel (0) target = $region53
    $region52: #{tpu_custom_call.1} parent=1 // pred_region
      %2423 = dma.done [#allocation4], 512
    $region53: #{tpu_custom_call.1} parent=1 // pred_fallthru
      _
    %2424 = vsyncpa [#allocation3], 1
    %2425 = vsyncpa [#allocation4], 1

</llo_original>
